<compile_context>
chip_gen: v7x
topology: tpu7x:2x2x1
jax: 0.10.0
libtpu: 0.0.40
codegen_flags: <defaults>
</compile_context>

<pallas_src>
import functools

import numpy as np
import jax
import jax.numpy as jnp
from jax.experimental import pallas as pl
from jax.experimental.pallas import tpu as pltpu


def _round_up(n, m):
    return ((n + m - 1) // m) * m


# ---------------------------------------------------------------------------
# Fused kernel: h = x; for each layer: h = relu(h @ W_i + b_i) (no ReLU on the
# final Linear head). Dots take bf16 operands with f32 accumulation; the
# bias/ReLU epilogue stays f32 (free VALU slots under the MXU).
# ---------------------------------------------------------------------------
def _fused_mlp_kernel(*refs, num_layers):
    x_ref = refs[0]
    o_ref = refs[-1]
    h = x_ref[...].astype(jnp.float32)
    for i in range(num_layers):
        w = refs[1 + 2 * i][...]                        # bf16 banded weight
        b = refs[2 + 2 * i][...].astype(jnp.float32)    # (1, F_out) f32 epilogue
        h = jnp.dot(h.astype(jnp.bfloat16), w,
                    preferred_element_type=jnp.float32) + b
        if i < num_layers - 1:
            h = jnp.maximum(h, 0.0)
    o_ref[...] = h.astype(o_ref.dtype)


def _pick_m_block(M):
    """Row-tile size for the batch axis.

    Small batches: a single block, padded up to the 8-sublane granule.
    Larger batches: at least 2 grid steps (v7x has 2 TensorCores -> 'parallel'
    axis shards across them) and at most 512 rows per block (good HBM-roofline
    utilization, safe inside v7x's 64 MiB VMEM with f32 intermediates and
    double-buffered I/O tiles).
    """
    if M <= 32:
        return _round_up(M, 8)
    return min(512, _round_up(pl.cdiv(M, 2), 8))


def _fused_forward(x_flat, Ws, bs):
    """x_flat: (M, F0) f32; Ws[i]: (F_i, F_{i+1}) bf16; bs[i]: (1, F_{i+1}) bf16."""
    M, F0 = x_flat.shape
    num_layers = len(Ws)
    out_pad = int(Ws[-1].shape[1])

    m_block = _pick_m_block(M)
    M_pad = _round_up(M, m_block)
    if M_pad != M:
        # Pad rows are free (zero input -> finite garbage rows, sliced off).
        x_flat = jnp.pad(x_flat, ((0, M_pad - M), (0, 0)))
    grid = (M_pad // m_block,)

    def _const_spec(shape):
        # Grid-invariant operand (index_map is constant): one VMEM buffer is
        # enough; double-buffering it would just waste VMEM.
        try:
            return pl.BlockSpec(shape, lambda i: (0, 0),
                                pipeline_mode=pl.Buffered(1))
        except TypeError:  # older BlockSpec signature without pipeline_mode
            return pl.BlockSpec(shape, lambda i: (0, 0))

    in_specs = [pl.BlockSpec((m_block, F0), lambda i: (i, 0))]
    args = [x_flat]
    for W, b in zip(Ws, bs):
        in_specs.append(_const_spec(W.shape))
        in_specs.append(_const_spec(b.shape))
        args.append(W)
        args.append(b)
    out_spec = pl.BlockSpec((m_block, out_pad), lambda i: (i, 0))

    # Explicit VMEM budget: single-buffered bf16 weights/biases +
    # double-buffered x/out tiles + f32 intermediates (widest layer), with 2x
    # headroom, clamped comfortably under v7x's 64 MiB physical VMEM.
    weight_bytes = sum(int(np.prod(W.shape)) * W.dtype.itemsize for W in Ws)
    bias_bytes = sum(int(np.prod(b.shape)) * b.dtype.itemsize for b in bs)
    max_f = max([F0] + [int(W.shape[1]) for W in Ws])
    tile_bytes = (2 * m_block * F0 * 4 + 2 * m_block * out_pad * 4
                  + 4 * m_block * max_f * 4)
    vmem_limit = int(min(max(2 * (weight_bytes + bias_bytes + tile_bytes),
                             16 * 1024 * 1024),
                         48 * 1024 * 1024))

    flops = 2 * M_pad * sum(int(W.shape[0]) * int(W.shape[1]) for W in Ws)
    bytes_accessed = int(4 * x_flat.size + weight_bytes + bias_bytes
                         + 4 * M_pad * out_pad)

    kernel = functools.partial(_fused_mlp_kernel, num_layers=num_layers)
    y = pl.pallas_call(
        kernel,
        out_shape=jax.ShapeDtypeStruct((M_pad, out_pad), jnp.float32),
        grid=grid,
        in_specs=in_specs,
        out_specs=out_spec,
        compiler_params=pltpu.CompilerParams(
            dimension_semantics=("parallel",),
            vmem_limit_bytes=vmem_limit),
        cost_estimate=pl.CostEstimate(
            flops=flops, transcendentals=0, bytes_accessed=bytes_accessed),
    )(*args)
    return y[:M]


# ---------------------------------------------------------------------------
# Parameter init (PyTorch-style uniform +-1/sqrt(fan_in)), deterministic.
# depth=2, batch=False (no BatchNorm), outsize=8.
# ---------------------------------------------------------------------------
def init_params(key, depth, outsize, in_len):
    params = {"convs": []}
    conv_defs = [(2, 16, 5, 2), (16, 24, 3, 2)]
    inc = 24
    for _ in range(depth):
        outc = inc + 8
        conv_defs.append((inc, outc, 3, 2))
        inc = outc

    L = in_len
    for (ci, co, k, s) in conv_defs:
        key, kw, kb = jax.random.split(key, 3)
        bound = 1.0 / float(np.sqrt(ci * k))
        w = jax.random.uniform(kw, (co, ci, k), jnp.float32, -bound, bound)
        b = jax.random.uniform(kb, (co,), jnp.float32, -bound, bound)
        params["convs"].append((w, b, s))
        L = (L - k) // s + 1

    flat_features = inc * L
    key, kw, kb = jax.random.split(key, 3)
    bound = 1.0 / float(np.sqrt(flat_features))
    params["lin_w"] = jax.random.uniform(
        kw, (outsize, flat_features), jnp.float32, -bound, bound)
    params["lin_b"] = jax.random.uniform(
        kb, (outsize,), jnp.float32, -bound, bound)
    return params


# ---------------------------------------------------------------------------
# One-time packing: fold each Conv1d into a banded dense matrix over
# time-major channels-last features, pad every output width to a multiple of
# 128 lanes (zero columns/bias), fold torch's channel-major Flatten into the
# Linear weight, and store everything in bfloat16 (halves the dominant weight
# DMA; native MXU operand dtype on all generations).
# ---------------------------------------------------------------------------
def pack_params(raw, in_len, lane=128):
    Ws, bs = [], []
    L_in = in_len
    F_in = raw["convs"][0][0].shape[1] * in_len  # first layer: channel-major x.reshape
    first = True
    C_last = None

    for (w, b, s) in raw["convs"]:
        w_np = np.asarray(w, np.float32)
        b_np = np.asarray(b, np.float32)
        C_out, C_in, k = w_np.shape
        L_out = (L_in - k) // s + 1
        F_out = _round_up(L_out * C_out, lane)
        Wb = np.zeros((F_in, F_out), np.float32)
        bb = np.zeros((1, F_out), np.float32)
        for t_out in range(L_out):
            col0 = t_out * C_out
            bb[0, col0:col0 + C_out] = b_np
            for j in range(k):
                t_in = t_out * s + j
                for c_in in range(C_in):
                    # layer 1 rows are channel-major (matches x.reshape(N,-1));
                    # later layers use the time-major layout produced here.
                    r = (c_in * L_in + t_in) if first else (t_in * C_in + c_in)
                    Wb[r, col0:col0 + C_out] = w_np[:, c_in, j]
        Ws.append(jnp.asarray(Wb, jnp.bfloat16))
        bs.append(jnp.asarray(bb, jnp.bfloat16))
        F_in = F_out
        L_in = L_out
        C_last = C_out
        first = False

    # Linear head: permute columns from torch's channel-major Flatten (c*L + t)
    # to our time-major layout (t*C + c); pad outsize to 128 lanes.
    lin_w = np.asarray(raw["lin_w"], np.float32)   # (outsize, C_last * L_in)
    lin_b = np.asarray(raw["lin_b"], np.float32)
    outsize = lin_w.shape[0]
    F_out = _round_up(outsize, lane)
    Wb = np.zeros((F_in, F_out), np.float32)
    bb = np.zeros((1, F_out), np.float32)
    for t in range(L_in):
        for c in range(C_last):
            Wb[t * C_last + c, :outsize] = lin_w[:, c * L_in + t]
    bb[0, :outsize] = lin_b
    Ws.append(jnp.asarray(Wb, jnp.bfloat16))
    bs.append(jnp.asarray(bb, jnp.bfloat16))

    return {"Ws": Ws, "bs": bs, "outsize": outsize}


def convnet_forward(packed, x):
    # Dropout(0.2) -> identity in eval mode.
    N = x.shape[0]
    x_flat = x.reshape(N, -1).astype(jnp.float32)   # contiguous flatten, free
    y_pad = _fused_forward(x_flat, packed["Ws"], packed["bs"])
    return y_pad[:, :packed["outsize"]]             # drop lane padding once


# ---------------------------------------------------------------------------
# Pure-JAX f32 reference (im2col per layer) for a numerical sanity check.
# ---------------------------------------------------------------------------
def _reference_forward(raw, x):
    h = x
    for (w, b, s) in raw["convs"]:
        N, C, L = h.shape
        out_c, in_c, k = w.shape
        L_out = (L - k) // s + 1
        idx = jnp.arange(L_out)[:, None] * s + jnp.arange(k)[None, :]
        patches = h[:, :, idx]                                   # (N, C, L_out, k)
        patches = jnp.transpose(patches, (0, 2, 1, 3)).reshape(N * L_out, C * k)
        y = patches @ w.reshape(out_c, in_c * k).T + b
        y = jnp.maximum(y, 0.0)
        h = jnp.transpose(y.reshape(N, L_out, out_c), (0, 2, 1))
    N = h.shape[0]
    h = h.reshape(N, -1)
    return h @ raw["lin_w"].T + raw["lin_b"]


if __name__ == "__main__":
    depth = 2
    outsize = 8
    batch_size = 2
    in_len = 64  # length through 4 stride-2 convs: 64 -> 30 -> 14 -> 6 -> 2

    key = jax.random.PRNGKey(0)
    key, kx = jax.random.split(key)
    x = jax.random.normal(kx, (batch_size, 2, in_len), jnp.float32)

    raw = init_params(key, depth, outsize, in_len)
    packed = pack_params(raw, in_len)

    y = convnet_forward(packed, x)
    y = jax.block_until_ready(y)
    assert y.shape == (batch_size, outsize), y.shape

    # Reference is full f32; kernel stores weights/biases in bf16 and feeds
    # bf16 operands to the MXU, so tolerance is loosened accordingly.
    y_ref = _reference_forward(raw, x)
    assert jnp.allclose(y, y_ref, rtol=3e-2, atol=3e-2), \
        float(jnp.max(jnp.abs(y - y_ref)))

    print("KERNEL_OK")
</pallas_src>

<mosaic_0001>
module attributes {stable_mosaic.version = 11 : i64} {
  func.func @_fused_mlp_kernel(%arg0: i32, %arg1: memref<8x128xf32, #tpu.memory_space<vmem>>, %arg2: memref<128x512xbf16, #tpu.memory_space<vmem>>, %arg3: memref<1x512xbf16, #tpu.memory_space<vmem>>, %arg4: memref<512x384xbf16, #tpu.memory_space<vmem>>, %arg5: memref<1x384xbf16, #tpu.memory_space<vmem>>, %arg6: memref<384x256xbf16, #tpu.memory_space<vmem>>, %arg7: memref<1x256xbf16, #tpu.memory_space<vmem>>, %arg8: memref<256x128xbf16, #tpu.memory_space<vmem>>, %arg9: memref<1x128xbf16, #tpu.memory_space<vmem>>, %arg10: memref<128x128xbf16, #tpu.memory_space<vmem>>, %arg11: memref<1x128xbf16, #tpu.memory_space<vmem>>, %arg12: memref<8x128xf32, #tpu.memory_space<vmem>>) attributes {dimension_semantics = [#tpu.dimension_semantics<parallel>], iteration_bounds = array<i64: 1>, scalar_prefetch = 0 : i64, scratch_operands = 0 : i64, tpu.core_type = #tpu.core_type<tc>, window_params = [{transform_indices = @transform_0, window_bounds = array<i64: 8, 128>}, {pipeline_mode = #tpu.pipeline_mode<synchronous>, transform_indices = @transform_1, window_bounds = array<i64: 128, 512>}, {pipeline_mode = #tpu.pipeline_mode<synchronous>, transform_indices = @transform_2, window_bounds = array<i64: 1, 512>}, {pipeline_mode = #tpu.pipeline_mode<synchronous>, transform_indices = @transform_3, window_bounds = array<i64: 512, 384>}, {pipeline_mode = #tpu.pipeline_mode<synchronous>, transform_indices = @transform_4, window_bounds = array<i64: 1, 384>}, {pipeline_mode = #tpu.pipeline_mode<synchronous>, transform_indices = @transform_5, window_bounds = array<i64: 384, 256>}, {pipeline_mode = #tpu.pipeline_mode<synchronous>, transform_indices = @transform_6, window_bounds = array<i64: 1, 256>}, {pipeline_mode = #tpu.pipeline_mode<synchronous>, transform_indices = @transform_7, window_bounds = array<i64: 256, 128>}, {pipeline_mode = #tpu.pipeline_mode<synchronous>, transform_indices = @transform_8, window_bounds = array<i64: 1, 128>}, {pipeline_mode = #tpu.pipeline_mode<synchronous>, transform_indices = @transform_9, window_bounds = array<i64: 128, 128>}, {pipeline_mode = #tpu.pipeline_mode<synchronous>, transform_indices = @transform_10, window_bounds = array<i64: 1, 128>}, {transform_indices = @transform_11, window_bounds = array<i64: 8, 128>}]} {
    %c0 = arith.constant 0 : index
    %c0_0 = arith.constant 0 : index
    %0 = vector.load %arg1[%c0, %c0_0] : memref<8x128xf32, #tpu.memory_space<vmem>>, vector<8x128xf32>
    %c0_1 = arith.constant 0 : index
    %c0_2 = arith.constant 0 : index
    %1 = vector.load %arg2[%c0_1, %c0_2] : memref<128x512xbf16, #tpu.memory_space<vmem>>, vector<128x512xbf16>
    %c0_3 = arith.constant 0 : index
    %c0_4 = arith.constant 0 : index
    %2 = vector.load %arg3[%c0_3, %c0_4] : memref<1x512xbf16, #tpu.memory_space<vmem>>, vector<1x512xbf16>
    %3 = arith.extf %2 : vector<1x512xbf16> to vector<1x512xf32>
    %4 = arith.truncf %0 : vector<8x128xf32> to vector<8x128xbf16>
    %cst = arith.constant dense<0.000000e+00> : vector<8x512xf32>
    %5 = tpu.matmul %4, %1, %cst {dimension_numbers = #tpu.dot_dimension_numbers<[1], [0], [0], [1], [0, 0, 1, 1], [], []>} : vector<8x128xbf16>, vector<128x512xbf16>, vector<8x512xf32> -> vector<8x512xf32>
    %6 = vector.broadcast %3 : vector<1x512xf32> to vector<8x512xf32>
    %7 = arith.addf %5, %6 : vector<8x512xf32>
    %cst_5 = arith.constant 0.000000e+00 : f32
    %8 = vector.broadcast %cst_5 : f32 to vector<8x512xf32>
    %9 = arith.maximumf %7, %8 : vector<8x512xf32>
    %c0_6 = arith.constant 0 : index
    %c0_7 = arith.constant 0 : index
    %10 = vector.load %arg4[%c0_6, %c0_7] : memref<512x384xbf16, #tpu.memory_space<vmem>>, vector<512x384xbf16>
    %c0_8 = arith.constant 0 : index
    %c0_9 = arith.constant 0 : index
    %11 = vector.load %arg5[%c0_8, %c0_9] : memref<1x384xbf16, #tpu.memory_space<vmem>>, vector<1x384xbf16>
    %12 = arith.extf %11 : vector<1x384xbf16> to vector<1x384xf32>
    %13 = arith.truncf %9 : vector<8x512xf32> to vector<8x512xbf16>
    %cst_10 = arith.constant dense<0.000000e+00> : vector<8x384xf32>
    %14 = tpu.matmul %13, %10, %cst_10 {dimension_numbers = #tpu.dot_dimension_numbers<[1], [0], [0], [1], [0, 0, 1, 1], [], []>} : vector<8x512xbf16>, vector<512x384xbf16>, vector<8x384xf32> -> vector<8x384xf32>
    %15 = vector.broadcast %12 : vector<1x384xf32> to vector<8x384xf32>
    %16 = arith.addf %14, %15 : vector<8x384xf32>
    %cst_11 = arith.constant 0.000000e+00 : f32
    %17 = vector.broadcast %cst_11 : f32 to vector<8x384xf32>
    %18 = arith.maximumf %16, %17 : vector<8x384xf32>
    %c0_12 = arith.constant 0 : index
    %c0_13 = arith.constant 0 : index
    %19 = vector.load %arg6[%c0_12, %c0_13] : memref<384x256xbf16, #tpu.memory_space<vmem>>, vector<384x256xbf16>
    %c0_14 = arith.constant 0 : index
    %c0_15 = arith.constant 0 : index
    %20 = vector.load %arg7[%c0_14, %c0_15] : memref<1x256xbf16, #tpu.memory_space<vmem>>, vector<1x256xbf16>
    %21 = arith.extf %20 : vector<1x256xbf16> to vector<1x256xf32>
    %22 = arith.truncf %18 : vector<8x384xf32> to vector<8x384xbf16>
    %cst_16 = arith.constant dense<0.000000e+00> : vector<8x256xf32>
    %23 = tpu.matmul %22, %19, %cst_16 {dimension_numbers = #tpu.dot_dimension_numbers<[1], [0], [0], [1], [0, 0, 1, 1], [], []>} : vector<8x384xbf16>, vector<384x256xbf16>, vector<8x256xf32> -> vector<8x256xf32>
    %24 = vector.broadcast %21 : vector<1x256xf32> to vector<8x256xf32>
    %25 = arith.addf %23, %24 : vector<8x256xf32>
    %cst_17 = arith.constant 0.000000e+00 : f32
    %26 = vector.broadcast %cst_17 : f32 to vector<8x256xf32>
    %27 = arith.maximumf %25, %26 : vector<8x256xf32>
    %c0_18 = arith.constant 0 : index
    %c0_19 = arith.constant 0 : index
    %28 = vector.load %arg8[%c0_18, %c0_19] : memref<256x128xbf16, #tpu.memory_space<vmem>>, vector<256x128xbf16>
    %c0_20 = arith.constant 0 : index
    %c0_21 = arith.constant 0 : index
    %29 = vector.load %arg9[%c0_20, %c0_21] : memref<1x128xbf16, #tpu.memory_space<vmem>>, vector<1x128xbf16>
    %30 = arith.extf %29 : vector<1x128xbf16> to vector<1x128xf32>
    %31 = arith.truncf %27 : vector<8x256xf32> to vector<8x256xbf16>
    %cst_22 = arith.constant dense<0.000000e+00> : vector<8x128xf32>
    %32 = tpu.matmul %31, %28, %cst_22 {dimension_numbers = #tpu.dot_dimension_numbers<[1], [0], [0], [1], [0, 0, 1, 1], [], []>} : vector<8x256xbf16>, vector<256x128xbf16>, vector<8x128xf32> -> vector<8x128xf32>
    %33 = vector.broadcast %30 : vector<1x128xf32> to vector<8x128xf32>
    %34 = arith.addf %32, %33 : vector<8x128xf32>
    %cst_23 = arith.constant 0.000000e+00 : f32
    %35 = vector.broadcast %cst_23 : f32 to vector<8x128xf32>
    %36 = arith.maximumf %34, %35 : vector<8x128xf32>
    %c0_24 = arith.constant 0 : index
    %c0_25 = arith.constant 0 : index
    %37 = vector.load %arg10[%c0_24, %c0_25] : memref<128x128xbf16, #tpu.memory_space<vmem>>, vector<128x128xbf16>
    %c0_26 = arith.constant 0 : index
    %c0_27 = arith.constant 0 : index
    %38 = vector.load %arg11[%c0_26, %c0_27] : memref<1x128xbf16, #tpu.memory_space<vmem>>, vector<1x128xbf16>
    %39 = arith.extf %38 : vector<1x128xbf16> to vector<1x128xf32>
    %40 = arith.truncf %36 : vector<8x128xf32> to vector<8x128xbf16>
    %cst_28 = arith.constant dense<0.000000e+00> : vector<8x128xf32>
    %41 = tpu.matmul %40, %37, %cst_28 {dimension_numbers = #tpu.dot_dimension_numbers<[1], [0], [0], [1], [0, 0, 1, 1], [], []>} : vector<8x128xbf16>, vector<128x128xbf16>, vector<8x128xf32> -> vector<8x128xf32>
    %42 = vector.broadcast %39 : vector<1x128xf32> to vector<8x128xf32>
    %43 = arith.addf %41, %42 : vector<8x128xf32>
    %c0_29 = arith.constant 0 : index
    %c0_30 = arith.constant 0 : index
    %44 = vector.load %arg12[%c0_29, %c0_30] : memref<8x128xf32, #tpu.memory_space<vmem>>, vector<8x128xf32>
    tpu.vector_store %arg12[%c0_29, %c0_30], %43 {strides = array<i32>} : memref<8x128xf32, #tpu.memory_space<vmem>>, vector<8x128xf32>,
    return
  }
  func.func @transform_0(%arg0: i32) -> (i32, i32) {
    %c0_i32 = arith.constant 0 : i32
    %c0_i32_0 = arith.constant 0 : i32
    return %arg0, %c0_i32 : i32, i32
  }
  func.func @transform_1(%arg0: i32) -> (i32, i32) {
    %c0_i32 = arith.constant 0 : i32
    %c0_i32_0 = arith.constant 0 : i32
    %c0_i32_1 = arith.constant 0 : i32
    return %c0_i32, %c0_i32_0 : i32, i32
  }
  func.func @transform_2(%arg0: i32) -> (i32, i32) {
    %c0_i32 = arith.constant 0 : i32
    %c0_i32_0 = arith.constant 0 : i32
    %c0_i32_1 = arith.constant 0 : i32
    return %c0_i32, %c0_i32_0 : i32, i32
  }
  func.func @transform_3(%arg0: i32) -> (i32, i32) {
    %c0_i32 = arith.constant 0 : i32
    %c0_i32_0 = arith.constant 0 : i32
    %c0_i32_1 = arith.constant 0 : i32
    return %c0_i32, %c0_i32_0 : i32, i32
  }
  func.func @transform_4(%arg0: i32) -> (i32, i32) {
    %c0_i32 = arith.constant 0 : i32
    %c0_i32_0 = arith.constant 0 : i32
    %c0_i32_1 = arith.constant 0 : i32
    return %c0_i32, %c0_i32_0 : i32, i32
  }
  func.func @transform_5(%arg0: i32) -> (i32, i32) {
    %c0_i32 = arith.constant 0 : i32
    %c0_i32_0 = arith.constant 0 : i32
    %c0_i32_1 = arith.constant 0 : i32
    return %c0_i32, %c0_i32_0 : i32, i32
  }
  func.func @transform_6(%arg0: i32) -> (i32, i32) {
    %c0_i32 = arith.constant 0 : i32
    %c0_i32_0 = arith.constant 0 : i32
    %c0_i32_1 = arith.constant 0 : i32
    return %c0_i32, %c0_i32_0 : i32, i32
  }
  func.func @transform_7(%arg0: i32) -> (i32, i32) {
    %c0_i32 = arith.constant 0 : i32
    %c0_i32_0 = arith.constant 0 : i32
    %c0_i32_1 = arith.constant 0 : i32
    return %c0_i32, %c0_i32_0 : i32, i32
  }
  func.func @transform_8(%arg0: i32) -> (i32, i32) {
    %c0_i32 = arith.constant 0 : i32
    %c0_i32_0 = arith.constant 0 : i32
    %c0_i32_1 = arith.constant 0 : i32
    return %c0_i32, %c0_i32_0 : i32, i32
  }
  func.func @transform_9(%arg0: i32) -> (i32, i32) {
    %c0_i32 = arith.constant 0 : i32
    %c0_i32_0 = arith.constant 0 : i32
    %c0_i32_1 = arith.constant 0 : i32
    return %c0_i32, %c0_i32_0 : i32, i32
  }
  func.func @transform_10(%arg0: i32) -> (i32, i32) {
    %c0_i32 = arith.constant 0 : i32
    %c0_i32_0 = arith.constant 0 : i32
    %c0_i32_1 = arith.constant 0 : i32
    return %c0_i32, %c0_i32_0 : i32, i32
  }
  func.func @transform_11(%arg0: i32) -> (i32, i32) {
    %c0_i32 = arith.constant 0 : i32
    %c0_i32_0 = arith.constant 0 : i32
    return %arg0, %c0_i32 : i32, i32
  }
}

</mosaic_0001>

<llo_original>
// kernel: tpu_custom_call.1
$region0: #{tpu_custom_call.1}
  #allocation0 [shape = 'u32[]', space=smem, size = 0x4, offset = 0x4, fixed_abs, tag = 'smem constant byte address 0x4 - core index']
  #allocation1 [shape = 'u32[144,128]{1,0:T(1,128)}', space=vmem, size = 0x12000, scoped, tag = 'internal scratch']
  %s0 = inlined_call_operand.hbm [shape: f32[8,128], index: 0, kind: input, shape index: {}]
  %s1 = inlined_call_operand.hbm [shape: bf16[128,512], index: 1, kind: input, shape index: {}]
  %s2 = inlined_call_operand.vmem [shape: bf16[1,512], index: 2, kind: input, shape index: {}]
  %s3 = inlined_call_operand.hbm [shape: bf16[512,384], index: 3, kind: input, shape index: {}]
  %s4 = inlined_call_operand.vmem [shape: bf16[1,384], index: 4, kind: input, shape index: {}]
  %s5 = inlined_call_operand.hbm [shape: bf16[384,256], index: 5, kind: input, shape index: {}]
  %s6 = inlined_call_operand.vmem [shape: bf16[1,256], index: 6, kind: input, shape index: {}]
  %s7 = inlined_call_operand.hbm [shape: bf16[256,128], index: 7, kind: input, shape index: {}]
  %s8 = inlined_call_operand.vmem [shape: bf16[1,128], index: 8, kind: input, shape index: {}]
  %s9 = inlined_call_operand.hbm [shape: bf16[128,128], index: 9, kind: input, shape index: {}]
  %s10 = inlined_call_operand.vmem [shape: bf16[1,128], index: 10, kind: input, shape index: {}]
  %s11 = inlined_call_operand.hbm [shape: f32[8,128], index: 11, kind: output, shape index: {}]
  %s12 = sld [smem:[#allocation0]]
  $region78: #{tpu_custom_call.1} parent=0
    _
  %s14 = ssub.s32 1, %s12
  %s15 = scalar_select 0, %s14, %s12
  $region1: #{tpu_custom_call.1} parent=0
    #allocation2 [shape = 'u8[4096]{0}', space=vmem, size = 0x1000, scoped, tag = 'input window, operand 0, single buffered']
    #allocation3 [shape = 's32[1]{0}', space=sflag, size = 0x4, scoped, tag = 'scoped memory for tpu_custom_call.1']
    #allocation4 [shape = 's32[1]{0}', space=sflag, size = 0x4, scoped, tag = 'scoped memory for tpu_custom_call.1']
    #allocation5 [shape = 'u8[131072]{0}', space=vmem, size = 0x20000, scoped, tag = 'input window, operand 1, single buffered']
    #allocation6 [shape = 's32[1]{0}', space=sflag, size = 0x4, scoped, tag = 'scoped memory for tpu_custom_call.1']
    #allocation7 [shape = 'u8[393216]{0}', space=vmem, size = 0x60000, scoped, tag = 'input window, operand 3, single buffered']
    #allocation8 [shape = 'u8[196608]{0}', space=vmem, size = 0x30000, scoped, tag = 'input window, operand 5, single buffered']
    #allocation9 [shape = 's32[1]{0}', space=sflag, size = 0x4, scoped, tag = 'scoped memory for tpu_custom_call.1']
    #allocation10 [shape = 'u8[65536]{0}', space=vmem, size = 0x10000, scoped, tag = 'input window, operand 7, single buffered']
    #allocation11 [shape = 'u8[32768]{0}', space=vmem, size = 0x8000, scoped, tag = 'input window, operand 9, single buffered']
    #allocation12 [shape = 's32[1]{0}', space=sflag, size = 0x4, scoped, tag = 'scoped memory for tpu_custom_call.1']
    #allocation13 [shape = 'u8[4096]{0}', space=vmem, size = 0x1000, scoped, tag = 'output window, operand 0, single buffered']
    %16 = vsyncpa [#allocation3], 0
    %17 = vsyncpa [#allocation6], 0
    %18 = vsyncpa [#allocation9], 0
    %19 = vsyncpa [#allocation12], 0
    %20 = vsyncpa [#allocation4], 0
    // Predicated region
    $region2: #{tpu_custom_call.1} parent=1 // pred_check
      _
    $region3: #{tpu_custom_call.1} parent=1 // pred_check_branch
      %22 = sbr.rel (0) target = $region5
    $region4: #{tpu_custom_call.1} parent=1 // pred_region
      %s24 = ssub.s32 128, 128
      %25 = vsyncadd [#allocation3], %s24
      %s27 = sshll.u32 [#allocation2], 4
      %s28 = int_to_ptr.vmem [resolvable:$true] %s27
      %30 = dma.hbm_to_vmem [thread:$0]  %s0, 128, %s28, [#allocation3]
    $region5: #{tpu_custom_call.1} parent=1 // pred_fallthru
      _
    // Predicated region
    $region6: #{tpu_custom_call.1} parent=1 // pred_check
      _
    $region7: #{tpu_custom_call.1} parent=1 // pred_check_branch
      %32 = sbr.rel (0) target = $region9
    $region8: #{tpu_custom_call.1} parent=1 // pred_region
      %s34 = ssub.s32 4096, 4096
      %35 = vsyncadd [#allocation6], %s34
      %s36 = sshll.u32 [#allocation5], 4
      %s37 = int_to_ptr.vmem [resolvable:$true] %s36
      %42 = dma.hbm_to_vmem [thread:$0]  %s1, 4096, %s37, [#allocation6], 256, 256, 16
    $region9: #{tpu_custom_call.1} parent=1 // pred_fallthru
      _
    // Predicated region
    $region10: #{tpu_custom_call.1} parent=1 // pred_check
      _
    $region11: #{tpu_custom_call.1} parent=1 // pred_check_branch
      %44 = sbr.rel (0) target = $region13
    $region12: #{tpu_custom_call.1} parent=1 // pred_region
      _
    $region13: #{tpu_custom_call.1} parent=1 // pred_fallthru
      _
    // Predicated region
    $region14: #{tpu_custom_call.1} parent=1 // pred_check
      _
    $region15: #{tpu_custom_call.1} parent=1 // pred_check_branch
      %46 = sbr.rel (0) target = $region17
    $region16: #{tpu_custom_call.1} parent=1 // pred_region
      %s48 = ssub.s32 12288, 12288
      %49 = vsyncadd [#allocation6], %s48
      %s50 = sshll.u32 [#allocation7], 4
      %s51 = int_to_ptr.vmem [resolvable:$true] %s50
      %56 = dma.hbm_to_vmem [thread:$0]  %s3, 12288, %s51, [#allocation6], 192, 192, 12
    $region17: #{tpu_custom_call.1} parent=1 // pred_fallthru
      _
    // Predicated region
    $region18: #{tpu_custom_call.1} parent=1 // pred_check
      _
    $region19: #{tpu_custom_call.1} parent=1 // pred_check_branch
      %58 = sbr.rel (0) target = $region21
    $region20: #{tpu_custom_call.1} parent=1 // pred_region
      _
    $region21: #{tpu_custom_call.1} parent=1 // pred_fallthru
      _
    // Predicated region
    $region22: #{tpu_custom_call.1} parent=1 // pred_check
      _
    $region23: #{tpu_custom_call.1} parent=1 // pred_check_branch
      %60 = sbr.rel (0) target = $region25
    $region24: #{tpu_custom_call.1} parent=1 // pred_region
      %s62 = ssub.s32 6144, 6144
      %63 = vsyncadd [#allocation9], %s62
      %s64 = sshll.u32 [#allocation8], 4
      %s65 = int_to_ptr.vmem [resolvable:$true] %s64
      %70 = dma.hbm_to_vmem [thread:$0]  %s5, 6144, %s65, [#allocation9], 128, 128, 8
    $region25: #{tpu_custom_call.1} parent=1 // pred_fallthru
      _
    // Predicated region
    $region26: #{tpu_custom_call.1} parent=1 // pred_check
      _
    $region27: #{tpu_custom_call.1} parent=1 // pred_check_branch
      %72 = sbr.rel (0) target = $region29
    $region28: #{tpu_custom_call.1} parent=1 // pred_region
      _
    $region29: #{tpu_custom_call.1} parent=1 // pred_fallthru
      _
    // Predicated region
    $region30: #{tpu_custom_call.1} parent=1 // pred_check
      _
    $region31: #{tpu_custom_call.1} parent=1 // pred_check_branch
      %74 = sbr.rel (0) target = $region33
    $region32: #{tpu_custom_call.1} parent=1 // pred_region
      %s76 = ssub.s32 2048, 2048
      %77 = vsyncadd [#allocation9], %s76
      %s78 = sshll.u32 [#allocation10], 4
      %s79 = int_to_ptr.vmem [resolvable:$true] %s78
      %84 = dma.hbm_to_vmem [thread:$0]  %s7, 2048, %s79, [#allocation9], 64, 64, 4
    $region33: #{tpu_custom_call.1} parent=1 // pred_fallthru
      _
    // Predicated region
    $region34: #{tpu_custom_call.1} parent=1 // pred_check
      _
    $region35: #{tpu_custom_call.1} parent=1 // pred_check_branch
      %86 = sbr.rel (0) target = $region37
    $region36: #{tpu_custom_call.1} parent=1 // pred_region
      _
    $region37: #{tpu_custom_call.1} parent=1 // pred_fallthru
      _
    // Predicated region
    $region38: #{tpu_custom_call.1} parent=1 // pred_check
      _
    $region39: #{tpu_custom_call.1} parent=1 // pred_check_branch
      %88 = sbr.rel (0) target = $region41
    $region40: #{tpu_custom_call.1} parent=1 // pred_region
      %s90 = ssub.s32 1024, 1024
      %91 = vsyncadd [#allocation12], %s90
      %s92 = sshll.u32 [#allocation11], 4
      %s93 = int_to_ptr.vmem [resolvable:$true] %s92
      %98 = dma.hbm_to_vmem [thread:$0]  %s9, 1024, %s93, [#allocation12], 64, 64, 4
    $region41: #{tpu_custom_call.1} parent=1 // pred_fallthru
      _
    // Predicated region
    $region42: #{tpu_custom_call.1} parent=1 // pred_check
      _
    $region43: #{tpu_custom_call.1} parent=1 // pred_check_branch
      %100 = sbr.rel (0) target = $region45
    $region44: #{tpu_custom_call.1} parent=1 // pred_region
      _
    $region45: #{tpu_custom_call.1} parent=1 // pred_fallthru
      _
    // Predicated region
    $region46: #{tpu_custom_call.1} parent=1 // pred_check
      _
    $region47: #{tpu_custom_call.1} parent=1 // pred_check_branch
      %102 = sbr.rel (0) target = $region49
    $region48: #{tpu_custom_call.1} parent=1 // pred_region
      %103 = dma.done [#allocation3], 128
    $region49: #{tpu_custom_call.1} parent=1 // pred_fallthru
      _
    // Predicated region
    $region50: #{tpu_custom_call.1} parent=1 // pred_check
      _
    $region51: #{tpu_custom_call.1} parent=1 // pred_check_branch
      %105 = sbr.rel (0) target = $region53
    $region52: #{tpu_custom_call.1} parent=1 // pred_region
      %106 = dma.done [#allocation6], 4096
    $region53: #{tpu_custom_call.1} parent=1 // pred_fallthru
      _
    // Predicated region
    $region54: #{tpu_custom_call.1} parent=1 // pred_check
      _
    $region55: #{tpu_custom_call.1} parent=1 // pred_check_branch
      %108 = sbr.rel (0) target = $region57
    $region56: #{tpu_custom_call.1} parent=1 // pred_region
      %109 = dma.done [#allocation6], 12288
    $region57: #{tpu_custom_call.1} parent=1 // pred_fallthru
      _
    // Predicated region
    $region58: #{tpu_custom_call.1} parent=1 // pred_check
      _
    $region59: #{tpu_custom_call.1} parent=1 // pred_check_branch
      %111 = sbr.rel (0) target = $region61
    $region60: #{tpu_custom_call.1} parent=1 // pred_region
      %112 = dma.done [#allocation9], 6144
    $region61: #{tpu_custom_call.1} parent=1 // pred_fallthru
      _
    // Predicated region
    $region62: #{tpu_custom_call.1} parent=1 // pred_check
      _
    $region63: #{tpu_custom_call.1} parent=1 // pred_check_branch
      %114 = sbr.rel (0) target = $region65
    $region64: #{tpu_custom_call.1} parent=1 // pred_region
      %115 = dma.done [#allocation9], 2048
    $region65: #{tpu_custom_call.1} parent=1 // pred_fallthru
      _
    // Predicated region
    $region66: #{tpu_custom_call.1} parent=1 // pred_check
      _
    $region67: #{tpu_custom_call.1} parent=1 // pred_check_branch
      %117 = sbr.rel (0) target = $region69
    $region68: #{tpu_custom_call.1} parent=1 // pred_region
      %118 = dma.done [#allocation12], 1024
    $region69: #{tpu_custom_call.1} parent=1 // pred_fallthru
      _
    %v120 = vld [vmem:[#allocation2] sm:$0xff]
    %v121 = vld [vmem:[#allocation5] sm:$0xff]
    %v122 = vld [vmem:[#allocation5 + $0x8] sm:$0xff]
    %v123 = vld [vmem:[#allocation5 + $0x10] sm:$0xff]
    %v124 = vld [vmem:[#allocation5 + $0x18] sm:$0xff]
    %v125 = vld [vmem:[#allocation5 + $0x20] sm:$0xff]
    %v126 = vld [vmem:[#allocation5 + $0x28] sm:$0xff]
    %v127 = vld [vmem:[#allocation5 + $0x30] sm:$0xff]
    %v128 = vld [vmem:[#allocation5 + $0x38] sm:$0xff]
    %v129 = vld [vmem:[#allocation5 + $0x40] sm:$0xff]
    %v130 = vld [vmem:[#allocation5 + $0x48] sm:$0xff]
    %v131 = vld [vmem:[#allocation5 + $0x50] sm:$0xff]
    %v132 = vld [vmem:[#allocation5 + $0x58] sm:$0xff]
    %v133 = vld [vmem:[#allocation5 + $0x60] sm:$0xff]
    %v134 = vld [vmem:[#allocation5 + $0x68] sm:$0xff]
    %v135 = vld [vmem:[#allocation5 + $0x70] sm:$0xff]
    %v136 = vld [vmem:[#allocation5 + $0x78] sm:$0xff]
    %v137 = vld [vmem:[#allocation5 + $0x80] sm:$0xff]
    %v138 = vld [vmem:[#allocation5 + $0x88] sm:$0xff]
    %v139 = vld [vmem:[#allocation5 + $0x90] sm:$0xff]
    %v140 = vld [vmem:[#allocation5 + $0x98] sm:$0xff]
    %v141 = vld [vmem:[#allocation5 + $0xa0] sm:$0xff]
    %v142 = vld [vmem:[#allocation5 + $0xa8] sm:$0xff]
    %v143 = vld [vmem:[#allocation5 + $0xb0] sm:$0xff]
    %v144 = vld [vmem:[#allocation5 + $0xb8] sm:$0xff]
    %v145 = vld [vmem:[#allocation5 + $0xc0] sm:$0xff]
    %v146 = vld [vmem:[#allocation5 + $0xc8] sm:$0xff]
    %v147 = vld [vmem:[#allocation5 + $0xd0] sm:$0xff]
    %v148 = vld [vmem:[#allocation5 + $0xd8] sm:$0xff]
    %v149 = vld [vmem:[#allocation5 + $0xe0] sm:$0xff]
    %v150 = vld [vmem:[#allocation5 + $0xe8] sm:$0xff]
    %v151 = vld [vmem:[#allocation5 + $0xf0] sm:$0xff]
    %v152 = vld [vmem:[#allocation5 + $0xf8] sm:$0xff]
    %v153 = vld [vmem:[%s2] sm:$0xf]
    %v154 = vunpack.c.l.bf16 %v153
    %v155 = vpack.c.bf16 %v120, %v120
    %v157 = vlaneseq
    %v158 = vshrl.u32 %v157, 7
    %v159 = vsub.s32 0, %v158
    %v160 = vrot.slane %v154, %v159
    %v161 = vlaneseq
    %v162 = vshrl.u32 %v161, 7
    %v163 = vsub.s32 2, %v162
    %v164 = vrot.slane %v154, %v163
    %v165 = vlaneseq
    %v166 = vshrl.u32 %v165, 7
    %v167 = vsub.s32 4, %v166
    %v168 = vrot.slane %v154, %v167
    %v169 = vlaneseq
    %v170 = vshrl.u32 %v169, 7
    %v171 = vsub.s32 6, %v170
    %v172 = vrot.slane %v154, %v171
    %v177 = vlaneseq
    %v178 = vshrl.u32 %v177, 7
    %v179 = vsub.s32 0, %v178
    %v180 = vrot.slane %v160, %v179
    %v181 = vlaneseq
    %v182 = vshrl.u32 %v181, 7
    %v183 = vsub.s32 0, %v182
    %v184 = vrot.slane %v164, %v183
    %v185 = vlaneseq
    %v186 = vshrl.u32 %v185, 7
    %v187 = vsub.s32 0, %v186
    %v188 = vrot.slane %v168, %v187
    %v189 = vlaneseq
    %v190 = vshrl.u32 %v189, 7
    %v191 = vsub.s32 0, %v190
    %v192 = vrot.slane %v172, %v191
    %v225 = vunpack.c.l.b16 %v121
    %v226 = vunpack.c.h.b16 %v121
    %v227 = vunpack.c.l.b16 %v122
    %v228 = vunpack.c.h.b16 %v122
    %v229 = vunpack.c.l.b16 %v123
    %v230 = vunpack.c.h.b16 %v123
    %v231 = vunpack.c.l.b16 %v124
    %v232 = vunpack.c.h.b16 %v124
    %v233 = vunpack.c.l.b16 %v125
    %v234 = vunpack.c.h.b16 %v125
    %v235 = vunpack.c.l.b16 %v126
    %v236 = vunpack.c.h.b16 %v126
    %v237 = vunpack.c.l.b16 %v127
    %v238 = vunpack.c.h.b16 %v127
    %v239 = vunpack.c.l.b16 %v128
    %v240 = vunpack.c.h.b16 %v128
    %v241 = vunpack.c.l.b16 %v129
    %v242 = vunpack.c.h.b16 %v129
    %v243 = vunpack.c.l.b16 %v130
    %v244 = vunpack.c.h.b16 %v130
    %v245 = vunpack.c.l.b16 %v131
    %v246 = vunpack.c.h.b16 %v131
    %v247 = vunpack.c.l.b16 %v132
    %v248 = vunpack.c.h.b16 %v132
    %v249 = vunpack.c.l.b16 %v133
    %v250 = vunpack.c.h.b16 %v133
    %v251 = vunpack.c.l.b16 %v134
    %v252 = vunpack.c.h.b16 %v134
    %v253 = vunpack.c.l.b16 %v135
    %v254 = vunpack.c.h.b16 %v135
    %v255 = vunpack.c.l.b16 %v136
    %v256 = vunpack.c.h.b16 %v136
    %v257 = vunpack.c.l.b16 %v137
    %v258 = vunpack.c.h.b16 %v137
    %v259 = vunpack.c.l.b16 %v138
    %v260 = vunpack.c.h.b16 %v138
    %v261 = vunpack.c.l.b16 %v139
    %v262 = vunpack.c.h.b16 %v139
    %v263 = vunpack.c.l.b16 %v140
    %v264 = vunpack.c.h.b16 %v140
    %v265 = vunpack.c.l.b16 %v141
    %v266 = vunpack.c.h.b16 %v141
    %v267 = vunpack.c.l.b16 %v142
    %v268 = vunpack.c.h.b16 %v142
    %v269 = vunpack.c.l.b16 %v143
    %v270 = vunpack.c.h.b16 %v143
    %v271 = vunpack.c.l.b16 %v144
    %v272 = vunpack.c.h.b16 %v144
    %v273 = vunpack.c.l.b16 %v145
    %v274 = vunpack.c.h.b16 %v145
    %v275 = vunpack.c.l.b16 %v146
    %v276 = vunpack.c.h.b16 %v146
    %v277 = vunpack.c.l.b16 %v147
    %v278 = vunpack.c.h.b16 %v147
    %v279 = vunpack.c.l.b16 %v148
    %v280 = vunpack.c.h.b16 %v148
    %v281 = vunpack.c.l.b16 %v149
    %v282 = vunpack.c.h.b16 %v149
    %v283 = vunpack.c.l.b16 %v150
    %v284 = vunpack.c.h.b16 %v150
    %v285 = vunpack.c.l.b16 %v151
    %v286 = vunpack.c.h.b16 %v151
    %v287 = vunpack.c.l.b16 %v152
    %v288 = vunpack.c.h.b16 %v152
    %v289 = vpack.c.b16 %v229, %v225
    %v290 = vpack.c.b16 %v230, %v226
    %v291 = vpack.c.b16 %v231, %v227
    %v292 = vpack.c.b16 %v232, %v228
    %v293 = vpack.c.b16 %v237, %v233
    %v294 = vpack.c.b16 %v238, %v234
    %v295 = vpack.c.b16 %v239, %v235
    %v296 = vpack.c.b16 %v240, %v236
    %v297 = vpack.c.b16 %v245, %v241
    %v298 = vpack.c.b16 %v246, %v242
    %v299 = vpack.c.b16 %v247, %v243
    %v300 = vpack.c.b16 %v248, %v244
    %v301 = vpack.c.b16 %v253, %v249
    %v302 = vpack.c.b16 %v254, %v250
    %v303 = vpack.c.b16 %v255, %v251
    %v304 = vpack.c.b16 %v256, %v252
    %v305 = vpack.c.b16 %v261, %v257
    %v306 = vpack.c.b16 %v262, %v258
    %v307 = vpack.c.b16 %v263, %v259
    %v308 = vpack.c.b16 %v264, %v260
    %v309 = vpack.c.b16 %v269, %v265
    %v310 = vpack.c.b16 %v270, %v266
    %v311 = vpack.c.b16 %v271, %v267
    %v312 = vpack.c.b16 %v272, %v268
    %v313 = vpack.c.b16 %v277, %v273
    %v314 = vpack.c.b16 %v278, %v274
    %v315 = vpack.c.b16 %v279, %v275
    %v316 = vpack.c.b16 %v280, %v276
    %v317 = vpack.c.b16 %v285, %v281
    %v318 = vpack.c.b16 %v286, %v282
    %v319 = vpack.c.b16 %v287, %v283
    %v320 = vpack.c.b16 %v288, %v284
    %353 = vmatprep.subr.bf16.mxu0 %v290
    %354 = vmatpush1.bf16.msra.mxu0 %v289
    %355 = vmatprep.subr.bf16.mxu0 %v294
    %356 = vmatpush1.bf16.msra.mxu0 %v293
    %357 = vmatprep.subr.bf16.mxu0 %v298
    %358 = vmatpush1.bf16.msra.mxu0 %v297
    %359 = vmatprep.subr.bf16.mxu0 %v302
    %360 = vmatpush1.bf16.msra.mxu0 %v301
    %361 = vmatprep.subr.bf16.mxu0 %v306
    %362 = vmatpush1.bf16.msra.mxu0 %v305
    %363 = vmatprep.subr.bf16.mxu0 %v310
    %364 = vmatpush1.bf16.msra.mxu0 %v309
    %365 = vmatprep.subr.bf16.mxu0 %v314
    %366 = vmatpush1.bf16.msra.mxu0 %v313
    %367 = vmatprep.subr.bf16.mxu0 %v318
    %368 = vmatpush1.bf16.msra.mxu0 %v317
    %369 = vmatprep.subr.bf16.mxu0 0
    %370 = vmatpush1.bf16.msra.mxu0 0
    %371 = vmatprep.subr.bf16.mxu0 0
    %372 = vmatpush1.bf16.msra.mxu0 0
    %373 = vmatprep.subr.bf16.mxu0 0
    %374 = vmatpush1.bf16.msra.mxu0 0
    %375 = vmatprep.subr.bf16.mxu0 0
    %376 = vmatpush1.bf16.msra.mxu0 0
    %377 = vmatprep.subr.bf16.mxu0 0
    %378 = vmatpush1.bf16.msra.mxu0 0
    %379 = vmatprep.subr.bf16.mxu0 0
    %380 = vmatpush1.bf16.msra.mxu0 0
    %381 = vmatprep.subr.bf16.mxu0 0
    %382 = vmatpush1.bf16.msra.mxu0 0
    %383 = vmatprep.subr.bf16.mxu0 0
    %384 = vmatpush1.bf16.msra.mxu0 0
    %385 = vmatprep.mubr.bf16.mxu0 0
    %386 = vmatmul.mubr.bf16.gmra.mrb[0].mxu0 %v155
    %v387 = vpop.f32.mrb[0].mxu0
    %v388 = vadd.f32 %v180, %v387
    %v389 = vpop.f32.mrb[0].mxu0
    %v390 = vadd.f32 %v184, %v389
    %v391 = vpop.f32.mrb[0].mxu0
    %v392 = vpop.f32.mrb[0].mxu0
    %393 = vdwg.mxu0
    %394 = vmatprep.subr.bf16.mxu0 %v292
    %395 = vmatpush1.bf16.msra.mxu0 %v291
    %396 = vmatprep.subr.bf16.mxu0 %v296
    %397 = vmatpush1.bf16.msra.mxu0 %v295
    %398 = vmatprep.subr.bf16.mxu0 %v300
    %399 = vmatpush1.bf16.msra.mxu0 %v299
    %400 = vmatprep.subr.bf16.mxu0 %v304
    %401 = vmatpush1.bf16.msra.mxu0 %v303
    %402 = vmatprep.subr.bf16.mxu0 %v308
    %403 = vmatpush1.bf16.msra.mxu0 %v307
    %404 = vmatprep.subr.bf16.mxu0 %v312
    %405 = vmatpush1.bf16.msra.mxu0 %v311
    %406 = vmatprep.subr.bf16.mxu0 %v316
    %407 = vmatpush1.bf16.msra.mxu0 %v315
    %408 = vmatprep.subr.bf16.mxu0 %v320
    %409 = vmatpush1.bf16.msra.mxu0 %v319
    %410 = vmatprep.subr.bf16.mxu0 0
    %411 = vmatpush1.bf16.msra.mxu0 0
    %412 = vmatprep.subr.bf16.mxu0 0
    %413 = vmatpush1.bf16.msra.mxu0 0
    %414 = vmatprep.subr.bf16.mxu0 0
    %415 = vmatpush1.bf16.msra.mxu0 0
    %416 = vmatprep.subr.bf16.mxu0 0
    %417 = vmatpush1.bf16.msra.mxu0 0
    %418 = vmatprep.subr.bf16.mxu0 0
    %419 = vmatpush1.bf16.msra.mxu0 0
    %420 = vmatprep.subr.bf16.mxu0 0
    %421 = vmatpush1.bf16.msra.mxu0 0
    %422 = vmatprep.subr.bf16.mxu0 0
    %423 = vmatpush1.bf16.msra.mxu0 0
    %424 = vmatprep.subr.bf16.mxu0 0
    %425 = vmatpush1.bf16.msra.mxu0 0
    %426 = vmatprep.mubr.bf16.mxu0 0
    %427 = vmatmul.mubr.bf16.gmra.mrb[0].mxu0 %v155
    %v428 = vpop.f32.mrb[0].mxu0
    %v429 = vadd.f32 %v188, %v428
    %v430 = vpop.f32.mrb[0].mxu0
    %v431 = vadd.f32 %v192, %v430
    %v432 = vpop.f32.mrb[0].mxu0
    %v433 = vpop.f32.mrb[0].mxu0
    %434 = vdwg.mxu0
    %v435 = vmax.f32 %v388, 0.0
    %v436 = vmax.f32 %v390, 0.0
    %v437 = vmax.f32 %v429, 0.0
    %v438 = vmax.f32 %v431, 0.0
    %v439 = vld [vmem:[#allocation7] sm:$0xff]
    %v440 = vld [vmem:[#allocation7 + $0x8] sm:$0xf]
    %v441 = vld [vmem:[#allocation7 + $0xc] sm:$0xff]
    %v442 = vld [vmem:[#allocation7 + $0x14] sm:$0xf]
    %v443 = vld [vmem:[#allocation7 + $0x18] sm:$0xff]
    %v444 = vld [vmem:[#allocation7 + $0x20] sm:$0xf]
    %v445 = vld [vmem:[#allocation7 + $0x24] sm:$0xff]
    %v446 = vld [vmem:[#allocation7 + $0x2c] sm:$0xf]
    %v447 = vld [vmem:[#allocation7 + $0x30] sm:$0xff]
    %v448 = vld [vmem:[#allocation7 + $0x38] sm:$0xf]
    %v449 = vld [vmem:[#allocation7 + $0x3c] sm:$0xff]
    %v450 = vld [vmem:[#allocation7 + $0x44] sm:$0xf]
    %v451 = vld [vmem:[#allocation7 + $0x48] sm:$0xff]
    %v452 = vld [vmem:[#allocation7 + $0x50] sm:$0xf]
    %v453 = vld [vmem:[#allocation7 + $0x54] sm:$0xff]
    %v454 = vld [vmem:[#allocation7 + $0x5c] sm:$0xf]
    %v455 = vld [vmem:[#allocation7 + $0x60] sm:$0xff]
    %v456 = vld [vmem:[#allocation7 + $0x68] sm:$0xf]
    %v457 = vld [vmem:[#allocation7 + $0x6c] sm:$0xff]
    %v458 = vld [vmem:[#allocation7 + $0x74] sm:$0xf]
    %v459 = vld [vmem:[#allocation7 + $0x78] sm:$0xff]
    %v460 = vld [vmem:[#allocation7 + $0x80] sm:$0xf]
    %v461 = vld [vmem:[#allocation7 + $0x84] sm:$0xff]
    %v462 = vld [vmem:[#allocation7 + $0x8c] sm:$0xf]
    %v463 = vld [vmem:[#allocation7 + $0x90] sm:$0xff]
    %v464 = vld [vmem:[#allocation7 + $0x98] sm:$0xf]
    %v465 = vld [vmem:[#allocation7 + $0x9c] sm:$0xff]
    %v466 = vld [vmem:[#allocation7 + $0xa4] sm:$0xf]
    %v467 = vld [vmem:[#allocation7 + $0xa8] sm:$0xff]
    %v468 = vld [vmem:[#allocation7 + $0xb0] sm:$0xf]
    %v469 = vld [vmem:[#allocation7 + $0xb4] sm:$0xff]
    %v470 = vld [vmem:[#allocation7 + $0xbc] sm:$0xf]
    %v471 = vld [vmem:[#allocation7 + $0xc0] sm:$0xff]
    %v472 = vld [vmem:[#allocation7 + $0xc8] sm:$0xf]
    %v473 = vld [vmem:[#allocation7 + $0xcc] sm:$0xff]
    %v474 = vld [vmem:[#allocation7 + $0xd4] sm:$0xf]
    %v475 = vld [vmem:[#allocation7 + $0xd8] sm:$0xff]
    %v476 = vld [vmem:[#allocation7 + $0xe0] sm:$0xf]
    %v477 = vld [vmem:[#allocation7 + $0xe4] sm:$0xff]
    %v478 = vld [vmem:[#allocation7 + $0xec] sm:$0xf]
    %v479 = vld [vmem:[#allocation7 + $0xf0] sm:$0xff]
    %v480 = vld [vmem:[#allocation7 + $0xf8] sm:$0xf]
    %v481 = vld [vmem:[#allocation7 + $0xfc] sm:$0xff]
    %v482 = vld [vmem:[#allocation7 + $0x104] sm:$0xf]
    %v483 = vld [vmem:[#allocation7 + $0x108] sm:$0xff]
    %v484 = vld [vmem:[#allocation7 + $0x110] sm:$0xf]
    %v485 = vld [vmem:[#allocation7 + $0x114] sm:$0xff]
    %v486 = vld [vmem:[#allocation7 + $0x11c] sm:$0xf]
    %v487 = vld [vmem:[#allocation7 + $0x120] sm:$0xff]
    %v488 = vld [vmem:[#allocation7 + $0x128] sm:$0xf]
    %v489 = vld [vmem:[#allocation7 + $0x12c] sm:$0xff]
    %v490 = vld [vmem:[#allocation7 + $0x134] sm:$0xf]
    %v491 = vld [vmem:[#allocation7 + $0x138] sm:$0xff]
    %v492 = vld [vmem:[#allocation7 + $0x140] sm:$0xf]
    %v493 = vld [vmem:[#allocation7 + $0x144] sm:$0xff]
    %v494 = vld [vmem:[#allocation7 + $0x14c] sm:$0xf]
    %v495 = vld [vmem:[#allocation7 + $0x150] sm:$0xff]
    %v496 = vld [vmem:[#allocation7 + $0x158] sm:$0xf]
    %v497 = vld [vmem:[#allocation7 + $0x15c] sm:$0xff]
    %v498 = vld [vmem:[#allocation7 + $0x164] sm:$0xf]
    %v499 = vld [vmem:[#allocation7 + $0x168] sm:$0xff]
    %v500 = vld [vmem:[#allocation7 + $0x170] sm:$0xf]
    %v501 = vld [vmem:[#allocation7 + $0x174] sm:$0xff]
    %v502 = vld [vmem:[#allocation7 + $0x17c] sm:$0xf]
    %v503 = vld [vmem:[#allocation7 + $0x180] sm:$0xff]
    %v504 = vld [vmem:[#allocation7 + $0x188] sm:$0xf]
    %v505 = vld [vmem:[#allocation7 + $0x18c] sm:$0xff]
    %v506 = vld [vmem:[#allocation7 + $0x194] sm:$0xf]
    %v507 = vld [vmem:[#allocation7 + $0x198] sm:$0xff]
    %v508 = vld [vmem:[#allocation7 + $0x1a0] sm:$0xf]
    %v509 = vld [vmem:[#allocation7 + $0x1a4] sm:$0xff]
    %v510 = vld [vmem:[#allocation7 + $0x1ac] sm:$0xf]
    %v511 = vld [vmem:[#allocation7 + $0x1b0] sm:$0xff]
    %v512 = vld [vmem:[#allocation7 + $0x1b8] sm:$0xf]
    %v513 = vld [vmem:[#allocation7 + $0x1bc] sm:$0xff]
    %v514 = vld [vmem:[#allocation7 + $0x1c4] sm:$0xf]
    %v515 = vld [vmem:[#allocation7 + $0x1c8] sm:$0xff]
    %v516 = vld [vmem:[#allocation7 + $0x1d0] sm:$0xf]
    %v517 = vld [vmem:[#allocation7 + $0x1d4] sm:$0xff]
    %v518 = vld [vmem:[#allocation7 + $0x1dc] sm:$0xf]
    %v519 = vld [vmem:[#allocation7 + $0x1e0] sm:$0xff]
    %v520 = vld [vmem:[#allocation7 + $0x1e8] sm:$0xf]
    %v521 = vld [vmem:[#allocation7 + $0x1ec] sm:$0xff]
    %v522 = vld [vmem:[#allocation7 + $0x1f4] sm:$0xf]
    %v523 = vld [vmem:[#allocation7 + $0x1f8] sm:$0xff]
    %v524 = vld [vmem:[#allocation7 + $0x200] sm:$0xf]
    %v525 = vld [vmem:[#allocation7 + $0x204] sm:$0xff]
    %v526 = vld [vmem:[#allocation7 + $0x20c] sm:$0xf]
    %v527 = vld [vmem:[#allocation7 + $0x210] sm:$0xff]
    %v528 = vld [vmem:[#allocation7 + $0x218] sm:$0xf]
    %v529 = vld [vmem:[#allocation7 + $0x21c] sm:$0xff]
    %v530 = vld [vmem:[#allocation7 + $0x224] sm:$0xf]
    %v531 = vld [vmem:[#allocation7 + $0x228] sm:$0xff]
    %v532 = vld [vmem:[#allocation7 + $0x230] sm:$0xf]
    %v533 = vld [vmem:[#allocation7 + $0x234] sm:$0xff]
    %v534 = vld [vmem:[#allocation7 + $0x23c] sm:$0xf]
    %v535 = vld [vmem:[#allocation7 + $0x240] sm:$0xff]
    %v536 = vld [vmem:[#allocation7 + $0x248] sm:$0xf]
    %v537 = vld [vmem:[#allocation7 + $0x24c] sm:$0xff]
    %v538 = vld [vmem:[#allocation7 + $0x254] sm:$0xf]
    %v539 = vld [vmem:[#allocation7 + $0x258] sm:$0xff]
    %v540 = vld [vmem:[#allocation7 + $0x260] sm:$0xf]
    %v541 = vld [vmem:[#allocation7 + $0x264] sm:$0xff]
    %v542 = vld [vmem:[#allocation7 + $0x26c] sm:$0xf]
    %v543 = vld [vmem:[#allocation7 + $0x270] sm:$0xff]
    %v544 = vld [vmem:[#allocation7 + $0x278] sm:$0xf]
    %v545 = vld [vmem:[#allocation7 + $0x27c] sm:$0xff]
    %v546 = vld [vmem:[#allocation7 + $0x284] sm:$0xf]
    %v547 = vld [vmem:[#allocation7 + $0x288] sm:$0xff]
    %v548 = vld [vmem:[#allocation7 + $0x290] sm:$0xf]
    %v549 = vld [vmem:[#allocation7 + $0x294] sm:$0xff]
    %v550 = vld [vmem:[#allocation7 + $0x29c] sm:$0xf]
    %v551 = vld [vmem:[#allocation7 + $0x2a0] sm:$0xff]
    %v552 = vld [vmem:[#allocation7 + $0x2a8] sm:$0xf]
    %v553 = vld [vmem:[#allocation7 + $0x2ac] sm:$0xff]
    %v554 = vld [vmem:[#allocation7 + $0x2b4] sm:$0xf]
    %v555 = vld [vmem:[#allocation7 + $0x2b8] sm:$0xff]
    %v556 = vld [vmem:[#allocation7 + $0x2c0] sm:$0xf]
    %v557 = vld [vmem:[#allocation7 + $0x2c4] sm:$0xff]
    %v558 = vld [vmem:[#allocation7 + $0x2cc] sm:$0xf]
    %v559 = vld [vmem:[#allocation7 + $0x2d0] sm:$0xff]
    %v560 = vld [vmem:[#allocation7 + $0x2d8] sm:$0xf]
    %v561 = vld [vmem:[#allocation7 + $0x2dc] sm:$0xff]
    %v562 = vld [vmem:[#allocation7 + $0x2e4] sm:$0xf]
    %v563 = vld [vmem:[#allocation7 + $0x2e8] sm:$0xff]
    %v564 = vld [vmem:[#allocation7 + $0x2f0] sm:$0xf]
    %v565 = vld [vmem:[#allocation7 + $0x2f4] sm:$0xff]
    %v566 = vld [vmem:[#allocation7 + $0x2fc] sm:$0xf]
    %v567 = vld [vmem:[%s4] sm:$0x7]
    %v568 = vunpack.c.l.bf16 %v567
    %v569 = vpack.c.bf16 %v435, %v435
    %v570 = vpack.c.bf16 %v436, %v436
    %v571 = vpack.c.bf16 %v437, %v437
    %v572 = vpack.c.bf16 %v438, %v438
    %v574 = vlaneseq
    %v575 = vshrl.u32 %v574, 7
    %v576 = vsub.s32 0, %v575
    %v577 = vrot.slane %v568, %v576
    %v578 = vlaneseq
    %v579 = vshrl.u32 %v578, 7
    %v580 = vsub.s32 2, %v579
    %v581 = vrot.slane %v568, %v580
    %v582 = vlaneseq
    %v583 = vshrl.u32 %v582, 7
    %v584 = vsub.s32 4, %v583
    %v585 = vrot.slane %v568, %v584
    %v589 = vlaneseq
    %v590 = vshrl.u32 %v589, 7
    %v591 = vsub.s32 0, %v590
    %v592 = vrot.slane %v577, %v591
    %v593 = vlaneseq
    %v594 = vshrl.u32 %v593, 7
    %v595 = vsub.s32 0, %v594
    %v596 = vrot.slane %v581, %v595
    %v597 = vlaneseq
    %v598 = vshrl.u32 %v597, 7
    %v599 = vsub.s32 0, %v598
    %v600 = vrot.slane %v585, %v599
    %v729 = vunpack.c.l.b16 %v439
    %v730 = vunpack.c.h.b16 %v439
    %v731 = vunpack.c.l.b16 %v440
    %v732 = vunpack.c.l.b16 %v441
    %v733 = vunpack.c.h.b16 %v441
    %v734 = vunpack.c.l.b16 %v442
    %v735 = vunpack.c.l.b16 %v443
    %v736 = vunpack.c.h.b16 %v443
    %v737 = vunpack.c.l.b16 %v444
    %v738 = vunpack.c.l.b16 %v445
    %v739 = vunpack.c.h.b16 %v445
    %v740 = vunpack.c.l.b16 %v446
    %v741 = vunpack.c.l.b16 %v447
    %v742 = vunpack.c.h.b16 %v447
    %v743 = vunpack.c.l.b16 %v448
    %v744 = vunpack.c.l.b16 %v449
    %v745 = vunpack.c.h.b16 %v449
    %v746 = vunpack.c.l.b16 %v450
    %v747 = vunpack.c.l.b16 %v451
    %v748 = vunpack.c.h.b16 %v451
    %v749 = vunpack.c.l.b16 %v452
    %v750 = vunpack.c.l.b16 %v453
    %v751 = vunpack.c.h.b16 %v453
    %v752 = vunpack.c.l.b16 %v454
    %v753 = vunpack.c.l.b16 %v455
    %v754 = vunpack.c.h.b16 %v455
    %v755 = vunpack.c.l.b16 %v456
    %v756 = vunpack.c.l.b16 %v457
    %v757 = vunpack.c.h.b16 %v457
    %v758 = vunpack.c.l.b16 %v458
    %v759 = vunpack.c.l.b16 %v459
    %v760 = vunpack.c.h.b16 %v459
    %v761 = vunpack.c.l.b16 %v460
    %v762 = vunpack.c.l.b16 %v461
    %v763 = vunpack.c.h.b16 %v461
    %v764 = vunpack.c.l.b16 %v462
    %v765 = vunpack.c.l.b16 %v463
    %v766 = vunpack.c.h.b16 %v463
    %v767 = vunpack.c.l.b16 %v464
    %v768 = vunpack.c.l.b16 %v465
    %v769 = vunpack.c.h.b16 %v465
    %v770 = vunpack.c.l.b16 %v466
    %v771 = vunpack.c.l.b16 %v467
    %v772 = vunpack.c.h.b16 %v467
    %v773 = vunpack.c.l.b16 %v468
    %v774 = vunpack.c.l.b16 %v469
    %v775 = vunpack.c.h.b16 %v469
    %v776 = vunpack.c.l.b16 %v470
    %v777 = vunpack.c.l.b16 %v471
    %v778 = vunpack.c.h.b16 %v471
    %v779 = vunpack.c.l.b16 %v472
    %v780 = vunpack.c.l.b16 %v473
    %v781 = vunpack.c.h.b16 %v473
    %v782 = vunpack.c.l.b16 %v474
    %v783 = vunpack.c.l.b16 %v475
    %v784 = vunpack.c.h.b16 %v475
    %v785 = vunpack.c.l.b16 %v476
    %v786 = vunpack.c.l.b16 %v477
    %v787 = vunpack.c.h.b16 %v477
    %v788 = vunpack.c.l.b16 %v478
    %v789 = vunpack.c.l.b16 %v479
    %v790 = vunpack.c.h.b16 %v479
    %v791 = vunpack.c.l.b16 %v480
    %v792 = vunpack.c.l.b16 %v481
    %v793 = vunpack.c.h.b16 %v481
    %v794 = vunpack.c.l.b16 %v482
    %v795 = vunpack.c.l.b16 %v483
    %v796 = vunpack.c.h.b16 %v483
    %v797 = vunpack.c.l.b16 %v484
    %v798 = vunpack.c.l.b16 %v485
    %v799 = vunpack.c.h.b16 %v485
    %v800 = vunpack.c.l.b16 %v486
    %v801 = vunpack.c.l.b16 %v487
    %v802 = vunpack.c.h.b16 %v487
    %v803 = vunpack.c.l.b16 %v488
    %v804 = vunpack.c.l.b16 %v489
    %v805 = vunpack.c.h.b16 %v489
    %v806 = vunpack.c.l.b16 %v490
    %v807 = vunpack.c.l.b16 %v491
    %v808 = vunpack.c.h.b16 %v491
    %v809 = vunpack.c.l.b16 %v492
    %v810 = vunpack.c.l.b16 %v493
    %v811 = vunpack.c.h.b16 %v493
    %v812 = vunpack.c.l.b16 %v494
    %v813 = vunpack.c.l.b16 %v495
    %v814 = vunpack.c.h.b16 %v495
    %v815 = vunpack.c.l.b16 %v496
    %v816 = vunpack.c.l.b16 %v497
    %v817 = vunpack.c.h.b16 %v497
    %v818 = vunpack.c.l.b16 %v498
    %v819 = vunpack.c.l.b16 %v499
    %v820 = vunpack.c.h.b16 %v499
    %v821 = vunpack.c.l.b16 %v500
    %v822 = vunpack.c.l.b16 %v501
    %v823 = vunpack.c.h.b16 %v501
    %v824 = vunpack.c.l.b16 %v502
    %v825 = vunpack.c.l.b16 %v503
    %v826 = vunpack.c.h.b16 %v503
    %v827 = vunpack.c.l.b16 %v504
    %v828 = vunpack.c.l.b16 %v505
    %v829 = vunpack.c.h.b16 %v505
    %v830 = vunpack.c.l.b16 %v506
    %v831 = vunpack.c.l.b16 %v507
    %v832 = vunpack.c.h.b16 %v507
    %v833 = vunpack.c.l.b16 %v508
    %v834 = vunpack.c.l.b16 %v509
    %v835 = vunpack.c.h.b16 %v509
    %v836 = vunpack.c.l.b16 %v510
    %v837 = vunpack.c.l.b16 %v511
    %v838 = vunpack.c.h.b16 %v511
    %v839 = vunpack.c.l.b16 %v512
    %v840 = vunpack.c.l.b16 %v513
    %v841 = vunpack.c.h.b16 %v513
    %v842 = vunpack.c.l.b16 %v514
    %v843 = vunpack.c.l.b16 %v515
    %v844 = vunpack.c.h.b16 %v515
    %v845 = vunpack.c.l.b16 %v516
    %v846 = vunpack.c.l.b16 %v517
    %v847 = vunpack.c.h.b16 %v517
    %v848 = vunpack.c.l.b16 %v518
    %v849 = vunpack.c.l.b16 %v519
    %v850 = vunpack.c.h.b16 %v519
    %v851 = vunpack.c.l.b16 %v520
    %v852 = vunpack.c.l.b16 %v521
    %v853 = vunpack.c.h.b16 %v521
    %v854 = vunpack.c.l.b16 %v522
    %v855 = vunpack.c.l.b16 %v523
    %v856 = vunpack.c.h.b16 %v523
    %v857 = vunpack.c.l.b16 %v524
    %v858 = vunpack.c.l.b16 %v525
    %v859 = vunpack.c.h.b16 %v525
    %v860 = vunpack.c.l.b16 %v526
    %v861 = vunpack.c.l.b16 %v527
    %v862 = vunpack.c.h.b16 %v527
    %v863 = vunpack.c.l.b16 %v528
    %v864 = vunpack.c.l.b16 %v529
    %v865 = vunpack.c.h.b16 %v529
    %v866 = vunpack.c.l.b16 %v530
    %v867 = vunpack.c.l.b16 %v531
    %v868 = vunpack.c.h.b16 %v531
    %v869 = vunpack.c.l.b16 %v532
    %v870 = vunpack.c.l.b16 %v533
    %v871 = vunpack.c.h.b16 %v533
    %v872 = vunpack.c.l.b16 %v534
    %v873 = vunpack.c.l.b16 %v535
    %v874 = vunpack.c.h.b16 %v535
    %v875 = vunpack.c.l.b16 %v536
    %v876 = vunpack.c.l.b16 %v537
    %v877 = vunpack.c.h.b16 %v537
    %v878 = vunpack.c.l.b16 %v538
    %v879 = vunpack.c.l.b16 %v539
    %v880 = vunpack.c.h.b16 %v539
    %v881 = vunpack.c.l.b16 %v540
    %v882 = vunpack.c.l.b16 %v541
    %v883 = vunpack.c.h.b16 %v541
    %v884 = vunpack.c.l.b16 %v542
    %v885 = vunpack.c.l.b16 %v543
    %v886 = vunpack.c.h.b16 %v543
    %v887 = vunpack.c.l.b16 %v544
    %v888 = vunpack.c.l.b16 %v545
    %v889 = vunpack.c.h.b16 %v545
    %v890 = vunpack.c.l.b16 %v546
    %v891 = vunpack.c.l.b16 %v547
    %v892 = vunpack.c.h.b16 %v547
    %v893 = vunpack.c.l.b16 %v548
    %v894 = vunpack.c.l.b16 %v549
    %v895 = vunpack.c.h.b16 %v549
    %v896 = vunpack.c.l.b16 %v550
    %v897 = vunpack.c.l.b16 %v551
    %v898 = vunpack.c.h.b16 %v551
    %v899 = vunpack.c.l.b16 %v552
    %v900 = vunpack.c.l.b16 %v553
    %v901 = vunpack.c.h.b16 %v553
    %v902 = vunpack.c.l.b16 %v554
    %v903 = vunpack.c.l.b16 %v555
    %v904 = vunpack.c.h.b16 %v555
    %v905 = vunpack.c.l.b16 %v556
    %v906 = vunpack.c.l.b16 %v557
    %v907 = vunpack.c.h.b16 %v557
    %v908 = vunpack.c.l.b16 %v558
    %v909 = vunpack.c.l.b16 %v559
    %v910 = vunpack.c.h.b16 %v559
    %v911 = vunpack.c.l.b16 %v560
    %v912 = vunpack.c.l.b16 %v561
    %v913 = vunpack.c.h.b16 %v561
    %v914 = vunpack.c.l.b16 %v562
    %v915 = vunpack.c.l.b16 %v563
    %v916 = vunpack.c.h.b16 %v563
    %v917 = vunpack.c.l.b16 %v564
    %v918 = vunpack.c.l.b16 %v565
    %v919 = vunpack.c.h.b16 %v565
    %v920 = vunpack.c.l.b16 %v566
    %v921 = vpack.c.b16 %v732, %v729
    %v922 = vpack.c.b16 %v733, %v730
    %v923 = vpack.c.b16 %v734, %v731
    %v924 = vpack.c.b16 %v738, %v735
    %v925 = vpack.c.b16 %v739, %v736
    %v926 = vpack.c.b16 %v740, %v737
    %v927 = vpack.c.b16 %v744, %v741
    %v928 = vpack.c.b16 %v745, %v742
    %v929 = vpack.c.b16 %v746, %v743
    %v930 = vpack.c.b16 %v750, %v747
    %v931 = vpack.c.b16 %v751, %v748
    %v932 = vpack.c.b16 %v752, %v749
    %v933 = vpack.c.b16 %v756, %v753
    %v934 = vpack.c.b16 %v757, %v754
    %v935 = vpack.c.b16 %v758, %v755
    %v936 = vpack.c.b16 %v762, %v759
    %v937 = vpack.c.b16 %v763, %v760
    %v938 = vpack.c.b16 %v764, %v761
    %v939 = vpack.c.b16 %v768, %v765
    %v940 = vpack.c.b16 %v769, %v766
    %v941 = vpack.c.b16 %v770, %v767
    %v942 = vpack.c.b16 %v774, %v771
    %v943 = vpack.c.b16 %v775, %v772
    %v944 = vpack.c.b16 %v776, %v773
    %v945 = vpack.c.b16 %v780, %v777
    %v946 = vpack.c.b16 %v781, %v778
    %v947 = vpack.c.b16 %v782, %v779
    %v948 = vpack.c.b16 %v786, %v783
    %v949 = vpack.c.b16 %v787, %v784
    %v950 = vpack.c.b16 %v788, %v785
    %v951 = vpack.c.b16 %v792, %v789
    %v952 = vpack.c.b16 %v793, %v790
    %v953 = vpack.c.b16 %v794, %v791
    %v954 = vpack.c.b16 %v798, %v795
    %v955 = vpack.c.b16 %v799, %v796
    %v956 = vpack.c.b16 %v800, %v797
    %v957 = vpack.c.b16 %v804, %v801
    %v958 = vpack.c.b16 %v805, %v802
    %v959 = vpack.c.b16 %v806, %v803
    %v960 = vpack.c.b16 %v810, %v807
    %v961 = vpack.c.b16 %v811, %v808
    %v962 = vpack.c.b16 %v812, %v809
    %v963 = vpack.c.b16 %v816, %v813
    %v964 = vpack.c.b16 %v817, %v814
    %v965 = vpack.c.b16 %v818, %v815
    %v966 = vpack.c.b16 %v822, %v819
    %v967 = vpack.c.b16 %v823, %v820
    %v968 = vpack.c.b16 %v824, %v821
    %v969 = vpack.c.b16 %v828, %v825
    %v970 = vpack.c.b16 %v829, %v826
    %v971 = vpack.c.b16 %v830, %v827
    %v972 = vpack.c.b16 %v834, %v831
    %v973 = vpack.c.b16 %v835, %v832
    %v974 = vpack.c.b16 %v836, %v833
    %v975 = vpack.c.b16 %v840, %v837
    %v976 = vpack.c.b16 %v841, %v838
    %v977 = vpack.c.b16 %v842, %v839
    %v978 = vpack.c.b16 %v846, %v843
    %v979 = vpack.c.b16 %v847, %v844
    %v980 = vpack.c.b16 %v848, %v845
    %v981 = vpack.c.b16 %v852, %v849
    %v982 = vpack.c.b16 %v853, %v850
    %v983 = vpack.c.b16 %v854, %v851
    %v984 = vpack.c.b16 %v858, %v855
    %v985 = vpack.c.b16 %v859, %v856
    %v986 = vpack.c.b16 %v860, %v857
    %v987 = vpack.c.b16 %v864, %v861
    %v988 = vpack.c.b16 %v865, %v862
    %v989 = vpack.c.b16 %v866, %v863
    %v990 = vpack.c.b16 %v870, %v867
    %v991 = vpack.c.b16 %v871, %v868
    %v992 = vpack.c.b16 %v872, %v869
    %v993 = vpack.c.b16 %v876, %v873
    %v994 = vpack.c.b16 %v877, %v874
    %v995 = vpack.c.b16 %v878, %v875
    %v996 = vpack.c.b16 %v882, %v879
    %v997 = vpack.c.b16 %v883, %v880
    %v998 = vpack.c.b16 %v884, %v881
    %v999 = vpack.c.b16 %v888, %v885
    %v1000 = vpack.c.b16 %v889, %v886
    %v1001 = vpack.c.b16 %v890, %v887
    %v1002 = vpack.c.b16 %v894, %v891
    %v1003 = vpack.c.b16 %v895, %v892
    %v1004 = vpack.c.b16 %v896, %v893
    %v1005 = vpack.c.b16 %v900, %v897
    %v1006 = vpack.c.b16 %v901, %v898
    %v1007 = vpack.c.b16 %v902, %v899
    %v1008 = vpack.c.b16 %v906, %v903
    %v1009 = vpack.c.b16 %v907, %v904
    %v1010 = vpack.c.b16 %v908, %v905
    %v1011 = vpack.c.b16 %v912, %v909
    %v1012 = vpack.c.b16 %v913, %v910
    %v1013 = vpack.c.b16 %v914, %v911
    %v1014 = vpack.c.b16 %v918, %v915
    %v1015 = vpack.c.b16 %v919, %v916
    %v1016 = vpack.c.b16 %v920, %v917
    %1113 = vmatprep.subr.bf16.mxu0 %v922
    %1114 = vmatpush1.bf16.msra.mxu0 %v921
    %1115 = vmatprep.subr.bf16.mxu0 %v925
    %1116 = vmatpush1.bf16.msra.mxu0 %v924
    %1117 = vmatprep.subr.bf16.mxu0 %v928
    %1118 = vmatpush1.bf16.msra.mxu0 %v927
    %1119 = vmatprep.subr.bf16.mxu0 %v931
    %1120 = vmatpush1.bf16.msra.mxu0 %v930
    %1121 = vmatprep.subr.bf16.mxu0 %v934
    %1122 = vmatpush1.bf16.msra.mxu0 %v933
    %1123 = vmatprep.subr.bf16.mxu0 %v937
    %1124 = vmatpush1.bf16.msra.mxu0 %v936
    %1125 = vmatprep.subr.bf16.mxu0 %v940
    %1126 = vmatpush1.bf16.msra.mxu0 %v939
    %1127 = vmatprep.subr.bf16.mxu0 %v943
    %1128 = vmatpush1.bf16.msra.mxu0 %v942
    %1129 = vmatprep.subr.bf16.mxu0 %v946
    %1130 = vmatpush1.bf16.msra.mxu0 %v945
    %1131 = vmatprep.subr.bf16.mxu0 %v949
    %1132 = vmatpush1.bf16.msra.mxu0 %v948
    %1133 = vmatprep.subr.bf16.mxu0 %v952
    %1134 = vmatpush1.bf16.msra.mxu0 %v951
    %1135 = vmatprep.subr.bf16.mxu0 %v955
    %1136 = vmatpush1.bf16.msra.mxu0 %v954
    %1137 = vmatprep.subr.bf16.mxu0 %v958
    %1138 = vmatpush1.bf16.msra.mxu0 %v957
    %1139 = vmatprep.subr.bf16.mxu0 %v961
    %1140 = vmatpush1.bf16.msra.mxu0 %v960
    %1141 = vmatprep.subr.bf16.mxu0 %v964
    %1142 = vmatpush1.bf16.msra.mxu0 %v963
    %1143 = vmatprep.subr.bf16.mxu0 %v967
    %1144 = vmatpush1.bf16.msra.mxu0 %v966
    %1145 = vmatprep.mubr.bf16.mxu0 %v570
    %1146 = vmatmul.mubr.bf16.gmra.mrb[0].mxu0 %v569
    %v1147 = vpop.f32.mrb[0].mxu0
    %v1148 = vadd.f32 %v592, %v1147
    %v1149 = vpop.f32.mrb[0].mxu0
    %v1150 = vadd.f32 %v596, %v1149
    %v1151 = vpop.f32.mrb[0].mxu0
    %v1152 = vpop.f32.mrb[0].mxu0
    %1153 = vdwg.mxu0
    %1154 = vmatprep.subr.bf16.mxu0 %v970
    %1155 = vmatpush1.bf16.msra.mxu0 %v969
    %1156 = vmatprep.subr.bf16.mxu0 %v973
    %1157 = vmatpush1.bf16.msra.mxu0 %v972
    %1158 = vmatprep.subr.bf16.mxu0 %v976
    %1159 = vmatpush1.bf16.msra.mxu0 %v975
    %1160 = vmatprep.subr.bf16.mxu0 %v979
    %1161 = vmatpush1.bf16.msra.mxu0 %v978
    %1162 = vmatprep.subr.bf16.mxu0 %v982
    %1163 = vmatpush1.bf16.msra.mxu0 %v981
    %1164 = vmatprep.subr.bf16.mxu0 %v985
    %1165 = vmatpush1.bf16.msra.mxu0 %v984
    %1166 = vmatprep.subr.bf16.mxu0 %v988
    %1167 = vmatpush1.bf16.msra.mxu0 %v987
    %1168 = vmatprep.subr.bf16.mxu0 %v991
    %1169 = vmatpush1.bf16.msra.mxu0 %v990
    %1170 = vmatprep.subr.bf16.mxu0 %v994
    %1171 = vmatpush1.bf16.msra.mxu0 %v993
    %1172 = vmatprep.subr.bf16.mxu0 %v997
    %1173 = vmatpush1.bf16.msra.mxu0 %v996
    %1174 = vmatprep.subr.bf16.mxu0 %v1000
    %1175 = vmatpush1.bf16.msra.mxu0 %v999
    %1176 = vmatprep.subr.bf16.mxu0 %v1003
    %1177 = vmatpush1.bf16.msra.mxu0 %v1002
    %1178 = vmatprep.subr.bf16.mxu0 %v1006
    %1179 = vmatpush1.bf16.msra.mxu0 %v1005
    %1180 = vmatprep.subr.bf16.mxu0 %v1009
    %1181 = vmatpush1.bf16.msra.mxu0 %v1008
    %1182 = vmatprep.subr.bf16.mxu0 %v1012
    %1183 = vmatpush1.bf16.msra.mxu0 %v1011
    %1184 = vmatprep.subr.bf16.mxu0 %v1015
    %1185 = vmatpush1.bf16.msra.mxu0 %v1014
    %1186 = vmatprep.mubr.bf16.mxu0 %v572
    %1187 = vmatmul.mubr.bf16.gmra.mrb[0].mxu0 %v571
    %v1188 = vpop.f32.mrb[0].mxu0
    %v1189 = vadd.f32 %v1148, %v1188
    %v1190 = vpop.f32.mrb[0].mxu0
    %v1191 = vadd.f32 %v1150, %v1190
    %v1192 = vpop.f32.mrb[0].mxu0
    %v1193 = vpop.f32.mrb[0].mxu0
    %1194 = vdwg.mxu0
    %1195 = vmatprep.subr.bf16.mxu0 0
    %1196 = vmatpush1.bf16.msra.mxu0 %v923
    %1197 = vmatprep.subr.bf16.mxu0 0
    %1198 = vmatpush1.bf16.msra.mxu0 %v926
    %1199 = vmatprep.subr.bf16.mxu0 0
    %1200 = vmatpush1.bf16.msra.mxu0 %v929
    %1201 = vmatprep.subr.bf16.mxu0 0
    %1202 = vmatpush1.bf16.msra.mxu0 %v932
    %1203 = vmatprep.subr.bf16.mxu0 0
    %1204 = vmatpush1.bf16.msra.mxu0 %v935
    %1205 = vmatprep.subr.bf16.mxu0 0
    %1206 = vmatpush1.bf16.msra.mxu0 %v938
    %1207 = vmatprep.subr.bf16.mxu0 0
    %1208 = vmatpush1.bf16.msra.mxu0 %v941
    %1209 = vmatprep.subr.bf16.mxu0 0
    %1210 = vmatpush1.bf16.msra.mxu0 %v944
    %1211 = vmatprep.subr.bf16.mxu0 0
    %1212 = vmatpush1.bf16.msra.mxu0 %v947
    %1213 = vmatprep.subr.bf16.mxu0 0
    %1214 = vmatpush1.bf16.msra.mxu0 %v950
    %1215 = vmatprep.subr.bf16.mxu0 0
    %1216 = vmatpush1.bf16.msra.mxu0 %v953
    %1217 = vmatprep.subr.bf16.mxu0 0
    %1218 = vmatpush1.bf16.msra.mxu0 %v956
    %1219 = vmatprep.subr.bf16.mxu0 0
    %1220 = vmatpush1.bf16.msra.mxu0 %v959
    %1221 = vmatprep.subr.bf16.mxu0 0
    %1222 = vmatpush1.bf16.msra.mxu0 %v962
    %1223 = vmatprep.subr.bf16.mxu0 0
    %1224 = vmatpush1.bf16.msra.mxu0 %v965
    %1225 = vmatprep.subr.bf16.mxu0 0
    %1226 = vmatpush1.bf16.msra.mxu0 %v968
    %1227 = vmatprep.mubr.bf16.mxu0 %v570
    %1228 = vmatmul.mubr.bf16.gmra.mrb[0].mxu0 %v569
    %v1229 = vpop.f32.mrb[0].mxu0
    %v1230 = vadd.f32 %v600, %v1229
    %v1231 = vpop.f32.mrb[0].mxu0
    %v1232 = vpop.f32.mrb[0].mxu0
    %v1233 = vpop.f32.mrb[0].mxu0
    %1234 = vdwg.mxu0
    %1235 = vmatprep.subr.bf16.mxu0 0
    %1236 = vmatpush1.bf16.msra.mxu0 %v971
    %1237 = vmatprep.subr.bf16.mxu0 0
    %1238 = vmatpush1.bf16.msra.mxu0 %v974
    %1239 = vmatprep.subr.bf16.mxu0 0
    %1240 = vmatpush1.bf16.msra.mxu0 %v977
    %1241 = vmatprep.subr.bf16.mxu0 0
    %1242 = vmatpush1.bf16.msra.mxu0 %v980
    %1243 = vmatprep.subr.bf16.mxu0 0
    %1244 = vmatpush1.bf16.msra.mxu0 %v983
    %1245 = vmatprep.subr.bf16.mxu0 0
    %1246 = vmatpush1.bf16.msra.mxu0 %v986
    %1247 = vmatprep.subr.bf16.mxu0 0
    %1248 = vmatpush1.bf16.msra.mxu0 %v989
    %1249 = vmatprep.subr.bf16.mxu0 0
    %1250 = vmatpush1.bf16.msra.mxu0 %v992
    %1251 = vmatprep.subr.bf16.mxu0 0
    %1252 = vmatpush1.bf16.msra.mxu0 %v995
    %1253 = vmatprep.subr.bf16.mxu0 0
    %1254 = vmatpush1.bf16.msra.mxu0 %v998
    %1255 = vmatprep.subr.bf16.mxu0 0
    %1256 = vmatpush1.bf16.msra.mxu0 %v1001
    %1257 = vmatprep.subr.bf16.mxu0 0
    %1258 = vmatpush1.bf16.msra.mxu0 %v1004
    %1259 = vmatprep.subr.bf16.mxu0 0
    %1260 = vmatpush1.bf16.msra.mxu0 %v1007
    %1261 = vmatprep.subr.bf16.mxu0 0
    %1262 = vmatpush1.bf16.msra.mxu0 %v1010
    %1263 = vmatprep.subr.bf16.mxu0 0
    %1264 = vmatpush1.bf16.msra.mxu0 %v1013
    %1265 = vmatprep.subr.bf16.mxu0 0
    %1266 = vmatpush1.bf16.msra.mxu0 %v1016
    %1267 = vmatprep.mubr.bf16.mxu0 %v572
    %1268 = vmatmul.mubr.bf16.gmra.mrb[0].mxu0 %v571
    %v1269 = vpop.f32.mrb[0].mxu0
    %v1270 = vadd.f32 %v1230, %v1269
    %v1271 = vpop.f32.mrb[0].mxu0
    %v1272 = vpop.f32.mrb[0].mxu0
    %v1273 = vpop.f32.mrb[0].mxu0
    %1274 = vdwg.mxu0
    %v1275 = vmax.f32 %v1189, 0.0
    %v1276 = vmax.f32 %v1191, 0.0
    %v1277 = vmax.f32 %v1270, 0.0
    %v1278 = vld [vmem:[#allocation8] sm:$0xff]
    %v1279 = vld [vmem:[#allocation8 + $0x8] sm:$0xff]
    %v1280 = vld [vmem:[#allocation8 + $0x10] sm:$0xff]
    %v1281 = vld [vmem:[#allocation8 + $0x18] sm:$0xff]
    %v1282 = vld [vmem:[#allocation8 + $0x20] sm:$0xff]
    %v1283 = vld [vmem:[#allocation8 + $0x28] sm:$0xff]
    %v1284 = vld [vmem:[#allocation8 + $0x30] sm:$0xff]
    %v1285 = vld [vmem:[#allocation8 + $0x38] sm:$0xff]
    %v1286 = vld [vmem:[#allocation8 + $0x40] sm:$0xff]
    %v1287 = vld [vmem:[#allocation8 + $0x48] sm:$0xff]
    %v1288 = vld [vmem:[#allocation8 + $0x50] sm:$0xff]
    %v1289 = vld [vmem:[#allocation8 + $0x58] sm:$0xff]
    %v1290 = vld [vmem:[#allocation8 + $0x60] sm:$0xff]
    %v1291 = vld [vmem:[#allocation8 + $0x68] sm:$0xff]
    %v1292 = vld [vmem:[#allocation8 + $0x70] sm:$0xff]
    %v1293 = vld [vmem:[#allocation8 + $0x78] sm:$0xff]
    %v1294 = vld [vmem:[#allocation8 + $0x80] sm:$0xff]
    %v1295 = vld [vmem:[#allocation8 + $0x88] sm:$0xff]
    %v1296 = vld [vmem:[#allocation8 + $0x90] sm:$0xff]
    %v1297 = vld [vmem:[#allocation8 + $0x98] sm:$0xff]
    %v1298 = vld [vmem:[#allocation8 + $0xa0] sm:$0xff]
    %v1299 = vld [vmem:[#allocation8 + $0xa8] sm:$0xff]
    %v1300 = vld [vmem:[#allocation8 + $0xb0] sm:$0xff]
    %v1301 = vld [vmem:[#allocation8 + $0xb8] sm:$0xff]
    %v1302 = vld [vmem:[#allocation8 + $0xc0] sm:$0xff]
    %v1303 = vld [vmem:[#allocation8 + $0xc8] sm:$0xff]
    %v1304 = vld [vmem:[#allocation8 + $0xd0] sm:$0xff]
    %v1305 = vld [vmem:[#allocation8 + $0xd8] sm:$0xff]
    %v1306 = vld [vmem:[#allocation8 + $0xe0] sm:$0xff]
    %v1307 = vld [vmem:[#allocation8 + $0xe8] sm:$0xff]
    %v1308 = vld [vmem:[#allocation8 + $0xf0] sm:$0xff]
    %v1309 = vld [vmem:[#allocation8 + $0xf8] sm:$0xff]
    %v1310 = vld [vmem:[#allocation8 + $0x100] sm:$0xff]
    %v1311 = vld [vmem:[#allocation8 + $0x108] sm:$0xff]
    %v1312 = vld [vmem:[#allocation8 + $0x110] sm:$0xff]
    %v1313 = vld [vmem:[#allocation8 + $0x118] sm:$0xff]
    %v1314 = vld [vmem:[#allocation8 + $0x120] sm:$0xff]
    %v1315 = vld [vmem:[#allocation8 + $0x128] sm:$0xff]
    %v1316 = vld [vmem:[#allocation8 + $0x130] sm:$0xff]
    %v1317 = vld [vmem:[#allocation8 + $0x138] sm:$0xff]
    %v1318 = vld [vmem:[#allocation8 + $0x140] sm:$0xff]
    %v1319 = vld [vmem:[#allocation8 + $0x148] sm:$0xff]
    %v1320 = vld [vmem:[#allocation8 + $0x150] sm:$0xff]
    %v1321 = vld [vmem:[#allocation8 + $0x158] sm:$0xff]
    %v1322 = vld [vmem:[#allocation8 + $0x160] sm:$0xff]
    %v1323 = vld [vmem:[#allocation8 + $0x168] sm:$0xff]
    %v1324 = vld [vmem:[#allocation8 + $0x170] sm:$0xff]
    %v1325 = vld [vmem:[#allocation8 + $0x178] sm:$0xff]
    %v1326 = vld [vmem:[%s6] sm:$0x3]
    %v1327 = vunpack.c.l.bf16 %v1326
    %v1328 = vpack.c.bf16 %v1275, %v1275
    %v1329 = vpack.c.bf16 %v1276, %v1276
    %v1330 = vpack.c.bf16 %v1277, %v1277
    %v1332 = vlaneseq
    %v1333 = vshrl.u32 %v1332, 7
    %v1334 = vsub.s32 0, %v1333
    %v1335 = vrot.slane %v1327, %v1334
    %v1336 = vlaneseq
    %v1337 = vshrl.u32 %v1336, 7
    %v1338 = vsub.s32 2, %v1337
    %v1339 = vrot.slane %v1327, %v1338
    %v1342 = vlaneseq
    %v1343 = vshrl.u32 %v1342, 7
    %v1344 = vsub.s32 0, %v1343
    %v1345 = vrot.slane %v1335, %v1344
    %v1346 = vlaneseq
    %v1347 = vshrl.u32 %v1346, 7
    %v1348 = vsub.s32 0, %v1347
    %v1349 = vrot.slane %v1339, %v1348
    %v1398 = vunpack.c.l.b16 %v1278
    %v1399 = vunpack.c.h.b16 %v1278
    %v1400 = vunpack.c.l.b16 %v1279
    %v1401 = vunpack.c.h.b16 %v1279
    %v1402 = vunpack.c.l.b16 %v1280
    %v1403 = vunpack.c.h.b16 %v1280
    %v1404 = vunpack.c.l.b16 %v1281
    %v1405 = vunpack.c.h.b16 %v1281
    %v1406 = vunpack.c.l.b16 %v1282
    %v1407 = vunpack.c.h.b16 %v1282
    %v1408 = vunpack.c.l.b16 %v1283
    %v1409 = vunpack.c.h.b16 %v1283
    %v1410 = vunpack.c.l.b16 %v1284
    %v1411 = vunpack.c.h.b16 %v1284
    %v1412 = vunpack.c.l.b16 %v1285
    %v1413 = vunpack.c.h.b16 %v1285
    %v1414 = vunpack.c.l.b16 %v1286
    %v1415 = vunpack.c.h.b16 %v1286
    %v1416 = vunpack.c.l.b16 %v1287
    %v1417 = vunpack.c.h.b16 %v1287
    %v1418 = vunpack.c.l.b16 %v1288
    %v1419 = vunpack.c.h.b16 %v1288
    %v1420 = vunpack.c.l.b16 %v1289
    %v1421 = vunpack.c.h.b16 %v1289
    %v1422 = vunpack.c.l.b16 %v1290
    %v1423 = vunpack.c.h.b16 %v1290
    %v1424 = vunpack.c.l.b16 %v1291
    %v1425 = vunpack.c.h.b16 %v1291
    %v1426 = vunpack.c.l.b16 %v1292
    %v1427 = vunpack.c.h.b16 %v1292
    %v1428 = vunpack.c.l.b16 %v1293
    %v1429 = vunpack.c.h.b16 %v1293
    %v1430 = vunpack.c.l.b16 %v1294
    %v1431 = vunpack.c.h.b16 %v1294
    %v1432 = vunpack.c.l.b16 %v1295
    %v1433 = vunpack.c.h.b16 %v1295
    %v1434 = vunpack.c.l.b16 %v1296
    %v1435 = vunpack.c.h.b16 %v1296
    %v1436 = vunpack.c.l.b16 %v1297
    %v1437 = vunpack.c.h.b16 %v1297
    %v1438 = vunpack.c.l.b16 %v1298
    %v1439 = vunpack.c.h.b16 %v1298
    %v1440 = vunpack.c.l.b16 %v1299
    %v1441 = vunpack.c.h.b16 %v1299
    %v1442 = vunpack.c.l.b16 %v1300
    %v1443 = vunpack.c.h.b16 %v1300
    %v1444 = vunpack.c.l.b16 %v1301
    %v1445 = vunpack.c.h.b16 %v1301
    %v1446 = vunpack.c.l.b16 %v1302
    %v1447 = vunpack.c.h.b16 %v1302
    %v1448 = vunpack.c.l.b16 %v1303
    %v1449 = vunpack.c.h.b16 %v1303
    %v1450 = vunpack.c.l.b16 %v1304
    %v1451 = vunpack.c.h.b16 %v1304
    %v1452 = vunpack.c.l.b16 %v1305
    %v1453 = vunpack.c.h.b16 %v1305
    %v1454 = vunpack.c.l.b16 %v1306
    %v1455 = vunpack.c.h.b16 %v1306
    %v1456 = vunpack.c.l.b16 %v1307
    %v1457 = vunpack.c.h.b16 %v1307
    %v1458 = vunpack.c.l.b16 %v1308
    %v1459 = vunpack.c.h.b16 %v1308
    %v1460 = vunpack.c.l.b16 %v1309
    %v1461 = vunpack.c.h.b16 %v1309
    %v1462 = vunpack.c.l.b16 %v1310
    %v1463 = vunpack.c.h.b16 %v1310
    %v1464 = vunpack.c.l.b16 %v1311
    %v1465 = vunpack.c.h.b16 %v1311
    %v1466 = vunpack.c.l.b16 %v1312
    %v1467 = vunpack.c.h.b16 %v1312
    %v1468 = vunpack.c.l.b16 %v1313
    %v1469 = vunpack.c.h.b16 %v1313
    %v1470 = vunpack.c.l.b16 %v1314
    %v1471 = vunpack.c.h.b16 %v1314
    %v1472 = vunpack.c.l.b16 %v1315
    %v1473 = vunpack.c.h.b16 %v1315
    %v1474 = vunpack.c.l.b16 %v1316
    %v1475 = vunpack.c.h.b16 %v1316
    %v1476 = vunpack.c.l.b16 %v1317
    %v1477 = vunpack.c.h.b16 %v1317
    %v1478 = vunpack.c.l.b16 %v1318
    %v1479 = vunpack.c.h.b16 %v1318
    %v1480 = vunpack.c.l.b16 %v1319
    %v1481 = vunpack.c.h.b16 %v1319
    %v1482 = vunpack.c.l.b16 %v1320
    %v1483 = vunpack.c.h.b16 %v1320
    %v1484 = vunpack.c.l.b16 %v1321
    %v1485 = vunpack.c.h.b16 %v1321
    %v1486 = vunpack.c.l.b16 %v1322
    %v1487 = vunpack.c.h.b16 %v1322
    %v1488 = vunpack.c.l.b16 %v1323
    %v1489 = vunpack.c.h.b16 %v1323
    %v1490 = vunpack.c.l.b16 %v1324
    %v1491 = vunpack.c.h.b16 %v1324
    %v1492 = vunpack.c.l.b16 %v1325
    %v1493 = vunpack.c.h.b16 %v1325
    %v1494 = vpack.c.b16 %v1400, %v1398
    %v1495 = vpack.c.b16 %v1401, %v1399
    %v1496 = vpack.c.b16 %v1404, %v1402
    %v1497 = vpack.c.b16 %v1405, %v1403
    %v1498 = vpack.c.b16 %v1408, %v1406
    %v1499 = vpack.c.b16 %v1409, %v1407
    %v1500 = vpack.c.b16 %v1412, %v1410
    %v1501 = vpack.c.b16 %v1413, %v1411
    %v1502 = vpack.c.b16 %v1416, %v1414
    %v1503 = vpack.c.b16 %v1417, %v1415
    %v1504 = vpack.c.b16 %v1420, %v1418
    %v1505 = vpack.c.b16 %v1421, %v1419
    %v1506 = vpack.c.b16 %v1424, %v1422
    %v1507 = vpack.c.b16 %v1425, %v1423
    %v1508 = vpack.c.b16 %v1428, %v1426
    %v1509 = vpack.c.b16 %v1429, %v1427
    %v1510 = vpack.c.b16 %v1432, %v1430
    %v1511 = vpack.c.b16 %v1433, %v1431
    %v1512 = vpack.c.b16 %v1436, %v1434
    %v1513 = vpack.c.b16 %v1437, %v1435
    %v1514 = vpack.c.b16 %v1440, %v1438
    %v1515 = vpack.c.b16 %v1441, %v1439
    %v1516 = vpack.c.b16 %v1444, %v1442
    %v1517 = vpack.c.b16 %v1445, %v1443
    %v1518 = vpack.c.b16 %v1448, %v1446
    %v1519 = vpack.c.b16 %v1449, %v1447
    %v1520 = vpack.c.b16 %v1452, %v1450
    %v1521 = vpack.c.b16 %v1453, %v1451
    %v1522 = vpack.c.b16 %v1456, %v1454
    %v1523 = vpack.c.b16 %v1457, %v1455
    %v1524 = vpack.c.b16 %v1460, %v1458
    %v1525 = vpack.c.b16 %v1461, %v1459
    %v1526 = vpack.c.b16 %v1464, %v1462
    %v1527 = vpack.c.b16 %v1465, %v1463
    %v1528 = vpack.c.b16 %v1468, %v1466
    %v1529 = vpack.c.b16 %v1469, %v1467
    %v1530 = vpack.c.b16 %v1472, %v1470
    %v1531 = vpack.c.b16 %v1473, %v1471
    %v1532 = vpack.c.b16 %v1476, %v1474
    %v1533 = vpack.c.b16 %v1477, %v1475
    %v1534 = vpack.c.b16 %v1480, %v1478
    %v1535 = vpack.c.b16 %v1481, %v1479
    %v1536 = vpack.c.b16 %v1484, %v1482
    %v1537 = vpack.c.b16 %v1485, %v1483
    %v1538 = vpack.c.b16 %v1488, %v1486
    %v1539 = vpack.c.b16 %v1489, %v1487
    %v1540 = vpack.c.b16 %v1492, %v1490
    %v1541 = vpack.c.b16 %v1493, %v1491
    %1590 = vmatprep.subr.bf16.mxu0 %v1495
    %1591 = vmatpush1.bf16.msra.mxu0 %v1494
    %1592 = vmatprep.subr.bf16.mxu0 %v1497
    %1593 = vmatpush1.bf16.msra.mxu0 %v1496
    %1594 = vmatprep.subr.bf16.mxu0 %v1499
    %1595 = vmatpush1.bf16.msra.mxu0 %v1498
    %1596 = vmatprep.subr.bf16.mxu0 %v1501
    %1597 = vmatpush1.bf16.msra.mxu0 %v1500
    %1598 = vmatprep.subr.bf16.mxu0 %v1503
    %1599 = vmatpush1.bf16.msra.mxu0 %v1502
    %1600 = vmatprep.subr.bf16.mxu0 %v1505
    %1601 = vmatpush1.bf16.msra.mxu0 %v1504
    %1602 = vmatprep.subr.bf16.mxu0 %v1507
    %1603 = vmatpush1.bf16.msra.mxu0 %v1506
    %1604 = vmatprep.subr.bf16.mxu0 %v1509
    %1605 = vmatpush1.bf16.msra.mxu0 %v1508
    %1606 = vmatprep.subr.bf16.mxu0 %v1511
    %1607 = vmatpush1.bf16.msra.mxu0 %v1510
    %1608 = vmatprep.subr.bf16.mxu0 %v1513
    %1609 = vmatpush1.bf16.msra.mxu0 %v1512
    %1610 = vmatprep.subr.bf16.mxu0 %v1515
    %1611 = vmatpush1.bf16.msra.mxu0 %v1514
    %1612 = vmatprep.subr.bf16.mxu0 %v1517
    %1613 = vmatpush1.bf16.msra.mxu0 %v1516
    %1614 = vmatprep.subr.bf16.mxu0 %v1519
    %1615 = vmatpush1.bf16.msra.mxu0 %v1518
    %1616 = vmatprep.subr.bf16.mxu0 %v1521
    %1617 = vmatpush1.bf16.msra.mxu0 %v1520
    %1618 = vmatprep.subr.bf16.mxu0 %v1523
    %1619 = vmatpush1.bf16.msra.mxu0 %v1522
    %1620 = vmatprep.subr.bf16.mxu0 %v1525
    %1621 = vmatpush1.bf16.msra.mxu0 %v1524
    %1622 = vmatprep.mubr.bf16.mxu0 %v1329
    %1623 = vmatmul.mubr.bf16.gmra.mrb[0].mxu0 %v1328
    %v1624 = vpop.f32.mrb[0].mxu0
    %v1625 = vadd.f32 %v1345, %v1624
    %v1626 = vpop.f32.mrb[0].mxu0
    %v1627 = vadd.f32 %v1349, %v1626
    %v1628 = vpop.f32.mrb[0].mxu0
    %v1629 = vpop.f32.mrb[0].mxu0
    %1630 = vdwg.mxu0
    %1631 = vmatprep.subr.bf16.mxu0 %v1527
    %1632 = vmatpush1.bf16.msra.mxu0 %v1526
    %1633 = vmatprep.subr.bf16.mxu0 %v1529
    %1634 = vmatpush1.bf16.msra.mxu0 %v1528
    %1635 = vmatprep.subr.bf16.mxu0 %v1531
    %1636 = vmatpush1.bf16.msra.mxu0 %v1530
    %1637 = vmatprep.subr.bf16.mxu0 %v1533
    %1638 = vmatpush1.bf16.msra.mxu0 %v1532
    %1639 = vmatprep.subr.bf16.mxu0 %v1535
    %1640 = vmatpush1.bf16.msra.mxu0 %v1534
    %1641 = vmatprep.subr.bf16.mxu0 %v1537
    %1642 = vmatpush1.bf16.msra.mxu0 %v1536
    %1643 = vmatprep.subr.bf16.mxu0 %v1539
    %1644 = vmatpush1.bf16.msra.mxu0 %v1538
    %1645 = vmatprep.subr.bf16.mxu0 %v1541
    %1646 = vmatpush1.bf16.msra.mxu0 %v1540
    %1647 = vmatprep.subr.bf16.mxu0 0
    %1648 = vmatpush1.bf16.msra.mxu0 0
    %1649 = vmatprep.subr.bf16.mxu0 0
    %1650 = vmatpush1.bf16.msra.mxu0 0
    %1651 = vmatprep.subr.bf16.mxu0 0
    %1652 = vmatpush1.bf16.msra.mxu0 0
    %1653 = vmatprep.subr.bf16.mxu0 0
    %1654 = vmatpush1.bf16.msra.mxu0 0
    %1655 = vmatprep.subr.bf16.mxu0 0
    %1656 = vmatpush1.bf16.msra.mxu0 0
    %1657 = vmatprep.subr.bf16.mxu0 0
    %1658 = vmatpush1.bf16.msra.mxu0 0
    %1659 = vmatprep.subr.bf16.mxu0 0
    %1660 = vmatpush1.bf16.msra.mxu0 0
    %1661 = vmatprep.subr.bf16.mxu0 0
    %1662 = vmatpush1.bf16.msra.mxu0 0
    %1663 = vmatprep.mubr.bf16.mxu0 0
    %1664 = vmatmul.mubr.bf16.gmra.mrb[0].mxu0 %v1330
    %v1665 = vpop.f32.mrb[0].mxu0
    %v1666 = vadd.f32 %v1625, %v1665
    %v1667 = vpop.f32.mrb[0].mxu0
    %v1668 = vadd.f32 %v1627, %v1667
    %v1669 = vpop.f32.mrb[0].mxu0
    %v1670 = vpop.f32.mrb[0].mxu0
    %1671 = vdwg.mxu0
    %v1672 = vmax.f32 %v1666, 0.0
    %v1673 = vmax.f32 %v1668, 0.0
    %v1674 = vld [vmem:[#allocation10] sm:$0xf]
    %v1675 = vld [vmem:[#allocation10 + $0x4] sm:$0xf]
    %v1676 = vld [vmem:[#allocation10 + $0x8] sm:$0xf]
    %v1677 = vld [vmem:[#allocation10 + $0xc] sm:$0xf]
    %v1678 = vld [vmem:[#allocation10 + $0x10] sm:$0xf]
    %v1679 = vld [vmem:[#allocation10 + $0x14] sm:$0xf]
    %v1680 = vld [vmem:[#allocation10 + $0x18] sm:$0xf]
    %v1681 = vld [vmem:[#allocation10 + $0x1c] sm:$0xf]
    %v1682 = vld [vmem:[#allocation10 + $0x20] sm:$0xf]
    %v1683 = vld [vmem:[#allocation10 + $0x24] sm:$0xf]
    %v1684 = vld [vmem:[#allocation10 + $0x28] sm:$0xf]
    %v1685 = vld [vmem:[#allocation10 + $0x2c] sm:$0xf]
    %v1686 = vld [vmem:[#allocation10 + $0x30] sm:$0xf]
    %v1687 = vld [vmem:[#allocation10 + $0x34] sm:$0xf]
    %v1688 = vld [vmem:[#allocation10 + $0x38] sm:$0xf]
    %v1689 = vld [vmem:[#allocation10 + $0x3c] sm:$0xf]
    %v1690 = vld [vmem:[#allocation10 + $0x40] sm:$0xf]
    %v1691 = vld [vmem:[#allocation10 + $0x44] sm:$0xf]
    %v1692 = vld [vmem:[#allocation10 + $0x48] sm:$0xf]
    %v1693 = vld [vmem:[#allocation10 + $0x4c] sm:$0xf]
    %v1694 = vld [vmem:[#allocation10 + $0x50] sm:$0xf]
    %v1695 = vld [vmem:[#allocation10 + $0x54] sm:$0xf]
    %v1696 = vld [vmem:[#allocation10 + $0x58] sm:$0xf]
    %v1697 = vld [vmem:[#allocation10 + $0x5c] sm:$0xf]
    %v1698 = vld [vmem:[#allocation10 + $0x60] sm:$0xf]
    %v1699 = vld [vmem:[#allocation10 + $0x64] sm:$0xf]
    %v1700 = vld [vmem:[#allocation10 + $0x68] sm:$0xf]
    %v1701 = vld [vmem:[#allocation10 + $0x6c] sm:$0xf]
    %v1702 = vld [vmem:[#allocation10 + $0x70] sm:$0xf]
    %v1703 = vld [vmem:[#allocation10 + $0x74] sm:$0xf]
    %v1704 = vld [vmem:[#allocation10 + $0x78] sm:$0xf]
    %v1705 = vld [vmem:[#allocation10 + $0x7c] sm:$0xf]
    %v1706 = vld [vmem:[%s8] sm:$0x1]
    %v1707 = vunpack.c.l.bf16 %v1706
    %v1708 = vpack.c.bf16 %v1672, %v1672
    %v1709 = vpack.c.bf16 %v1673, %v1673
    %v1710 = vlaneseq
    %v1711 = vshrl.u32 %v1710, 7
    %v1712 = vsub.s32 0, %v1711
    %v1713 = vrot.slane %v1707, %v1712
    %v1746 = vunpack.c.l.b16 %v1674
    %v1747 = vunpack.c.l.b16 %v1675
    %v1748 = vunpack.c.l.b16 %v1676
    %v1749 = vunpack.c.l.b16 %v1677
    %v1750 = vunpack.c.l.b16 %v1678
    %v1751 = vunpack.c.l.b16 %v1679
    %v1752 = vunpack.c.l.b16 %v1680
    %v1753 = vunpack.c.l.b16 %v1681
    %v1754 = vunpack.c.l.b16 %v1682
    %v1755 = vunpack.c.l.b16 %v1683
    %v1756 = vunpack.c.l.b16 %v1684
    %v1757 = vunpack.c.l.b16 %v1685
    %v1758 = vunpack.c.l.b16 %v1686
    %v1759 = vunpack.c.l.b16 %v1687
    %v1760 = vunpack.c.l.b16 %v1688
    %v1761 = vunpack.c.l.b16 %v1689
    %v1762 = vunpack.c.l.b16 %v1690
    %v1763 = vunpack.c.l.b16 %v1691
    %v1764 = vunpack.c.l.b16 %v1692
    %v1765 = vunpack.c.l.b16 %v1693
    %v1766 = vunpack.c.l.b16 %v1694
    %v1767 = vunpack.c.l.b16 %v1695
    %v1768 = vunpack.c.l.b16 %v1696
    %v1769 = vunpack.c.l.b16 %v1697
    %v1770 = vunpack.c.l.b16 %v1698
    %v1771 = vunpack.c.l.b16 %v1699
    %v1772 = vunpack.c.l.b16 %v1700
    %v1773 = vunpack.c.l.b16 %v1701
    %v1774 = vunpack.c.l.b16 %v1702
    %v1775 = vunpack.c.l.b16 %v1703
    %v1776 = vunpack.c.l.b16 %v1704
    %v1777 = vunpack.c.l.b16 %v1705
    %v1778 = vpack.c.b16 %v1747, %v1746
    %v1779 = vpack.c.b16 %v1749, %v1748
    %v1780 = vpack.c.b16 %v1751, %v1750
    %v1781 = vpack.c.b16 %v1753, %v1752
    %v1782 = vpack.c.b16 %v1755, %v1754
    %v1783 = vpack.c.b16 %v1757, %v1756
    %v1784 = vpack.c.b16 %v1759, %v1758
    %v1785 = vpack.c.b16 %v1761, %v1760
    %v1786 = vpack.c.b16 %v1763, %v1762
    %v1787 = vpack.c.b16 %v1765, %v1764
    %v1788 = vpack.c.b16 %v1767, %v1766
    %v1789 = vpack.c.b16 %v1769, %v1768
    %v1790 = vpack.c.b16 %v1771, %v1770
    %v1791 = vpack.c.b16 %v1773, %v1772
    %v1792 = vpack.c.b16 %v1775, %v1774
    %v1793 = vpack.c.b16 %v1777, %v1776
    %1810 = vmatprep.subr.bf16.mxu0 0
    %1811 = vmatpush1.bf16.msra.mxu0 %v1778
    %1812 = vmatprep.subr.bf16.mxu0 0
    %1813 = vmatpush1.bf16.msra.mxu0 %v1779
    %1814 = vmatprep.subr.bf16.mxu0 0
    %1815 = vmatpush1.bf16.msra.mxu0 %v1780
    %1816 = vmatprep.subr.bf16.mxu0 0
    %1817 = vmatpush1.bf16.msra.mxu0 %v1781
    %1818 = vmatprep.subr.bf16.mxu0 0
    %1819 = vmatpush1.bf16.msra.mxu0 %v1782
    %1820 = vmatprep.subr.bf16.mxu0 0
    %1821 = vmatpush1.bf16.msra.mxu0 %v1783
    %1822 = vmatprep.subr.bf16.mxu0 0
    %1823 = vmatpush1.bf16.msra.mxu0 %v1784
    %1824 = vmatprep.subr.bf16.mxu0 0
    %1825 = vmatpush1.bf16.msra.mxu0 %v1785
    %1826 = vmatprep.subr.bf16.mxu0 0
    %1827 = vmatpush1.bf16.msra.mxu0 %v1786
    %1828 = vmatprep.subr.bf16.mxu0 0
    %1829 = vmatpush1.bf16.msra.mxu0 %v1787
    %1830 = vmatprep.subr.bf16.mxu0 0
    %1831 = vmatpush1.bf16.msra.mxu0 %v1788
    %1832 = vmatprep.subr.bf16.mxu0 0
    %1833 = vmatpush1.bf16.msra.mxu0 %v1789
    %1834 = vmatprep.subr.bf16.mxu0 0
    %1835 = vmatpush1.bf16.msra.mxu0 %v1790
    %1836 = vmatprep.subr.bf16.mxu0 0
    %1837 = vmatpush1.bf16.msra.mxu0 %v1791
    %1838 = vmatprep.subr.bf16.mxu0 0
    %1839 = vmatpush1.bf16.msra.mxu0 %v1792
    %1840 = vmatprep.subr.bf16.mxu0 0
    %1841 = vmatpush1.bf16.msra.mxu0 %v1793
    %1842 = vmatprep.mubr.bf16.mxu0 %v1709
    %1843 = vmatmul.mubr.bf16.gmra.mrb[0].mxu0 %v1708
    %v1844 = vpop.f32.mrb[0].mxu0
    %v1845 = vadd.f32 %v1713, %v1844
    %v1846 = vpop.f32.mrb[0].mxu0
    %v1847 = vpop.f32.mrb[0].mxu0
    %v1848 = vpop.f32.mrb[0].mxu0
    %1849 = vdwg.mxu0
    %v1850 = vmax.f32 %v1845, 0.0
    %v1851 = vld [vmem:[#allocation11] sm:$0xf]
    %v1852 = vld [vmem:[#allocation11 + $0x4] sm:$0xf]
    %v1853 = vld [vmem:[#allocation11 + $0x8] sm:$0xf]
    %v1854 = vld [vmem:[#allocation11 + $0xc] sm:$0xf]
    %v1855 = vld [vmem:[#allocation11 + $0x10] sm:$0xf]
    %v1856 = vld [vmem:[#allocation11 + $0x14] sm:$0xf]
    %v1857 = vld [vmem:[#allocation11 + $0x18] sm:$0xf]
    %v1858 = vld [vmem:[#allocation11 + $0x1c] sm:$0xf]
    %v1859 = vld [vmem:[#allocation11 + $0x20] sm:$0xf]
    %v1860 = vld [vmem:[#allocation11 + $0x24] sm:$0xf]
    %v1861 = vld [vmem:[#allocation11 + $0x28] sm:$0xf]
    %v1862 = vld [vmem:[#allocation11 + $0x2c] sm:$0xf]
    %v1863 = vld [vmem:[#allocation11 + $0x30] sm:$0xf]
    %v1864 = vld [vmem:[#allocation11 + $0x34] sm:$0xf]
    %v1865 = vld [vmem:[#allocation11 + $0x38] sm:$0xf]
    %v1866 = vld [vmem:[#allocation11 + $0x3c] sm:$0xf]
    %v1867 = vld [vmem:[%s10] sm:$0x1]
    %v1868 = vunpack.c.l.bf16 %v1867
    %v1869 = vpack.c.bf16 %v1850, %v1850
    %v1870 = vlaneseq
    %v1871 = vshrl.u32 %v1870, 7
    %v1872 = vsub.s32 0, %v1871
    %v1873 = vrot.slane %v1868, %v1872
    %v1890 = vunpack.c.l.b16 %v1851
    %v1891 = vunpack.c.l.b16 %v1852
    %v1892 = vunpack.c.l.b16 %v1853
    %v1893 = vunpack.c.l.b16 %v1854
    %v1894 = vunpack.c.l.b16 %v1855
    %v1895 = vunpack.c.l.b16 %v1856
    %v1896 = vunpack.c.l.b16 %v1857
    %v1897 = vunpack.c.l.b16 %v1858
    %v1898 = vunpack.c.l.b16 %v1859
    %v1899 = vunpack.c.l.b16 %v1860
    %v1900 = vunpack.c.l.b16 %v1861
    %v1901 = vunpack.c.l.b16 %v1862
    %v1902 = vunpack.c.l.b16 %v1863
    %v1903 = vunpack.c.l.b16 %v1864
    %v1904 = vunpack.c.l.b16 %v1865
    %v1905 = vunpack.c.l.b16 %v1866
    %v1906 = vpack.c.b16 %v1891, %v1890
    %v1907 = vpack.c.b16 %v1893, %v1892
    %v1908 = vpack.c.b16 %v1895, %v1894
    %v1909 = vpack.c.b16 %v1897, %v1896
    %v1910 = vpack.c.b16 %v1899, %v1898
    %v1911 = vpack.c.b16 %v1901, %v1900
    %v1912 = vpack.c.b16 %v1903, %v1902
    %v1913 = vpack.c.b16 %v1905, %v1904
    %1922 = vmatprep.subr.bf16.mxu0 0
    %1923 = vmatpush1.bf16.msra.mxu0 %v1906
    %1924 = vmatprep.subr.bf16.mxu0 0
    %1925 = vmatpush1.bf16.msra.mxu0 %v1907
    %1926 = vmatprep.subr.bf16.mxu0 0
    %1927 = vmatpush1.bf16.msra.mxu0 %v1908
    %1928 = vmatprep.subr.bf16.mxu0 0
    %1929 = vmatpush1.bf16.msra.mxu0 %v1909
    %1930 = vmatprep.subr.bf16.mxu0 0
    %1931 = vmatpush1.bf16.msra.mxu0 %v1910
    %1932 = vmatprep.subr.bf16.mxu0 0
    %1933 = vmatpush1.bf16.msra.mxu0 %v1911
    %1934 = vmatprep.subr.bf16.mxu0 0
    %1935 = vmatpush1.bf16.msra.mxu0 %v1912
    %1936 = vmatprep.subr.bf16.mxu0 0
    %1937 = vmatpush1.bf16.msra.mxu0 %v1913
    %1938 = vmatprep.subr.bf16.mxu0 0
    %1939 = vmatpush1.bf16.msra.mxu0 0
    %1940 = vmatprep.subr.bf16.mxu0 0
    %1941 = vmatpush1.bf16.msra.mxu0 0
    %1942 = vmatprep.subr.bf16.mxu0 0
    %1943 = vmatpush1.bf16.msra.mxu0 0
    %1944 = vmatprep.subr.bf16.mxu0 0
    %1945 = vmatpush1.bf16.msra.mxu0 0
    %1946 = vmatprep.subr.bf16.mxu0 0
    %1947 = vmatpush1.bf16.msra.mxu0 0
    %1948 = vmatprep.subr.bf16.mxu0 0
    %1949 = vmatpush1.bf16.msra.mxu0 0
    %1950 = vmatprep.subr.bf16.mxu0 0
    %1951 = vmatpush1.bf16.msra.mxu0 0
    %1952 = vmatprep.subr.bf16.mxu0 0
    %1953 = vmatpush1.bf16.msra.mxu0 0
    %1954 = vmatprep.mubr.bf16.mxu0 0
    %1955 = vmatmul.mubr.bf16.gmra.mrb[0].mxu0 %v1869
    %v1956 = vpop.f32.mrb[0].mxu0
    %v1957 = vadd.f32 %v1873, %v1956
    %v1958 = vpop.f32.mrb[0].mxu0
    %v1959 = vpop.f32.mrb[0].mxu0
    %v1960 = vpop.f32.mrb[0].mxu0
    %1961 = vdwg.mxu0
    %1962 = vst [vmem:[#allocation13] sm:$0xff] %v1957
    // Predicated region
    $region70: #{tpu_custom_call.1} parent=1 // pred_check
      _
    $region71: #{tpu_custom_call.1} parent=1 // pred_check_branch
      %1964 = sbr.rel (0) target = $region73
    $region72: #{tpu_custom_call.1} parent=1 // pred_region
      %s1966 = ssub.s32 128, 128
      %1967 = vsyncadd [#allocation4], %s1966
      %s1969 = sshll.u32 [#allocation13], 4
      %s1970 = int_to_ptr.vmem [resolvable:$true] %s1969
      %1972 = dma.vmem_to_hbm [thread:$0]  %s1970, 128, %s11, [#allocation4]
    $region73: #{tpu_custom_call.1} parent=1 // pred_fallthru
      _
    // Predicated region
    $region74: #{tpu_custom_call.1} parent=1 // pred_check
      _
    $region75: #{tpu_custom_call.1} parent=1 // pred_check_branch
      %1974 = sbr.rel (0) target = $region77
    $region76: #{tpu_custom_call.1} parent=1 // pred_region
      %1975 = dma.done [#allocation4], 128
    $region77: #{tpu_custom_call.1} parent=1 // pred_fallthru
      _
    %1976 = vsyncpa [#allocation3], 1
    %1977 = vsyncpa [#allocation6], 1
    %1978 = vsyncpa [#allocation9], 1
    %1979 = vsyncpa [#allocation12], 1
    %1980 = vsyncpa [#allocation4], 1

</llo_original>
